<compile_context>
chip_gen: v7x
topology: tpu7x:2x2x1
jax: 0.10.0
libtpu: 0.0.40
codegen_flags: <defaults>
</compile_context>

<pallas_src>
import functools

import numpy as np

import jax
import jax.numpy as jnp
from jax.experimental import pallas as pl
from jax.experimental.pallas import tpu as pltpu

ACTION_DIM = 8
CONTEXT_DIM = 8
CATEGORICAL_DIM = 4
HIDDEN_DIMS = (32, 64, 128, 256, 512)
TEMPERATURE = 0.5
BN_EPS = 1e-5
GUMBEL_EPS = 1e-7
LEAKY_SLOPE = 0.01          # nn.LeakyReLU default negative_slope

# 2-D packed weight-slab layout on a [784, 512] bf16 canvas.  Row offsets are
# multiples of 16 (bf16 sublane packing); column offsets are multiples of 128
# where possible.  fc_z is stored transposed so it takes a [4, 512] strip.
SLAB_ROWS = 784
SLAB_COLS = 512
_W_LAYOUT = {
    # name   : (row_off, col_off)       stored shape
    "enc4":    (0,   0),      # [256, 512]
    "dec0":    (256, 0),      # [512, 256]
    "enc3":    (256, 256),    # [128, 256]
    "dec1":    (384, 256),    # [256, 128]
    "enc2":    (640, 256),    # [ 64, 128]
    "dec2":    (384, 384),    # [128,  64]
    "dec3":    (512, 384),    # [ 64,  32]
    "enc1":    (576, 384),    # [ 32,  64]
    "enc0":    (608, 384),    # [ 16,  32]
    "final":   (624, 384),    # [ 32,   8]
    "fc_z":    (768, 0),      # [  4, 512]  (stored transposed)
    "dec_in":  (772, 0),      # [ 12, 512]
}

OUT_WIDTH = 128             # lane-dense packed (recon | q | zero pad) output


def _bn_leaky(h, gamma, beta):
    """Training-mode BatchNorm1d (biased batch stats) + LeakyReLU(0.01).

    Two-pass variance mean((h - mean)^2): numerically safer than
    E[x^2] - mean^2 at B=8 for negligible extra cost.
    """
    mean = jnp.mean(h, axis=0, keepdims=True)
    centered = h - mean
    var = jnp.mean(centered * centered, axis=0, keepdims=True)
    h = centered * jax.lax.rsqrt(var + BN_EPS) * gamma + beta
    return jnp.where(h >= 0, h, LEAKY_SLOPE * h)


def _vae_kernel(act_ref, w_ref, v_ref, out_ref, *, dims, enc_meta, fcz_meta,
                dec_in_meta, dec_meta, final_meta, temp):
    """Whole encoder -> fc_z -> gumbel-softmax -> decoder in one invocation."""
    A, C, Q = dims
    inv_temp = 1.0 / temp

    def wmat(roff, coff, nrow, ncol):        # static slice of the bf16 slab
        return w_ref[roff:roff + nrow, coff:coff + ncol]

    def vrow(row, dim):                      # static slice of the f32 slab
        return v_ref[row:row + 1, :dim]

    def dense_bn(x, roff, coff, din, dout, grow, brow):
        # No bias: it cancels exactly in training-mode BatchNorm.
        h = jnp.dot(x.astype(jnp.bfloat16), wmat(roff, coff, din, dout),
                    preferred_element_type=jnp.float32)
        return _bn_leaky(h, vrow(grow, dout), vrow(brow, dout))

    acts = act_ref[...]                      # [B, A + C + Q]  (one entry DMA)
    x = acts[:, :A + C]                      # torch.column_stack((action, ctx))
    ctx = acts[:, A:A + C]
    u = acts[:, A + C:A + C + Q]

    # ---- encoder: [Linear -> BatchNorm1d -> LeakyReLU] * 5 ----
    for m in enc_meta:
        x = dense_bn(x, *m)

    # ---- fc_z: latent logits q [B, Q]  (weight stored transposed [Q, 512]) ----
    roff, coff, din, dout, brow = fcz_meta
    w_zt = wmat(roff, coff, dout, din)
    q = jax.lax.dot_general(
        x.astype(jnp.bfloat16), w_zt,
        dimension_numbers=(((1,), (1,)), ((), ())),
        preferred_element_type=jnp.float32) + vrow(brow, dout)

    # ---- reparameterize: Gumbel-softmax with supplied uniform noise u ----
    g = -jnp.log(-jnp.log(u + GUMBEL_EPS) + GUMBEL_EPS)
    logits = (q + g) * inv_temp
    mx = jnp.max(logits, axis=-1, keepdims=True)
    e = jnp.exp(logits - mx)
    s = e / jnp.sum(e, axis=-1, keepdims=True)

    # ---- decoder_input: single matmul on column_stack((s, context)) ----
    roff, coff, din, dout, brow = dec_in_meta
    zc = jnp.concatenate([s, ctx], axis=-1)  # [B, Q + C]
    x = jnp.dot(zc.astype(jnp.bfloat16), wmat(roff, coff, din, dout),
                preferred_element_type=jnp.float32) + vrow(brow, dout)

    # ---- decoder: [Linear -> BatchNorm1d -> LeakyReLU] * 4 ----
    for m in dec_meta:
        x = dense_bn(x, *m)

    # ---- final_layer: Linear(hidden[0] -> action_dim) ----
    roff, coff, din, dout, brow = final_meta
    recon = jnp.dot(x.astype(jnp.bfloat16), wmat(roff, coff, din, dout),
                    preferred_element_type=jnp.float32) + vrow(brow, dout)

    # ---- one lane-dense packed output: [recon | q | zeros] -> [B, 128] ----
    b = recon.shape[0]
    pad = jnp.zeros((b, out_ref.shape[1] - (A + Q)), jnp.float32)
    out_ref[...] = jnp.concatenate([recon, q, pad], axis=-1).astype(out_ref.dtype)


def init_params(key, action_dim, context_dim, categorical_dim, hidden_dims):
    """Deterministic synthetic parameters (PyTorch-Linear-style uniform init)."""
    keys = iter(jax.random.split(key, 64))

    def dense(fan_in, fan_out):
        scale = 1.0 / float(fan_in) ** 0.5
        W = jax.random.uniform(next(keys), (fan_in, fan_out), jnp.float32,
                               -scale, scale)          # already [in, out]
        b = jax.random.uniform(next(keys), (fan_out,), jnp.float32,
                               -scale, scale)
        return W, b

    def bn(dim):
        g = 1.0 + 0.1 * jax.random.normal(next(keys), (dim,), jnp.float32)
        be = 0.05 * jax.random.normal(next(keys), (dim,), jnp.float32)
        return g, be

    params = {"enc": [], "dec": []}
    tmp = action_dim + context_dim
    for h in hidden_dims:
        W, b = dense(tmp, h)
        g, be = bn(h)
        params["enc"].append((W, b, g, be))
        tmp = h
    params["fc_z"] = dense(hidden_dims[-1], categorical_dim)
    params["dec_in"] = dense(categorical_dim + context_dim, hidden_dims[-1])
    rev = list(reversed(hidden_dims))
    for i in range(len(rev) - 1):
        W, b = dense(rev[i], rev[i + 1])
        g, be = bn(rev[i + 1])
        params["dec"].append((W, b, g, be))
    params["final"] = dense(rev[-1], action_dim)
    return params


def pack_params(params):
    """2-D pack every Linear weight into one dense bf16 slab [784, 512] and
    every BN gamma/beta + live Linear bias into one f32 row-slab [21, 512].

    Linear biases of layers that feed training-mode BatchNorm are dropped
    (mathematically inert in (h - mean)).  fc_z is stored transposed so it
    occupies a [4, 512] strip instead of 512 zero-padded full-width rows.
    Returns (w_slab, v_slab, static_meta).
    """
    w_blocks = []          # (row_off, col_off, stored weight as np.float32)
    v_rows = []            # 1-D vectors, one per row

    def place(name, W, transpose=False):
        Ws = W.T if transpose else W
        roff, coff = _W_LAYOUT[name]
        nrow, ncol = Ws.shape
        assert roff + nrow <= SLAB_ROWS and coff + ncol <= SLAB_COLS, name
        w_blocks.append((roff, coff, np.asarray(Ws, np.float32)))
        return roff, coff

    def add_v(vec):
        v_rows.append(np.asarray(vec, np.float32))
        return len(v_rows) - 1

    enc_meta = []
    for i, (W, _b, g, be) in enumerate(params["enc"]):    # bias dropped (pre-BN)
        din, dout = W.shape
        roff, coff = place(f"enc{i}", W)
        enc_meta.append((roff, coff, din, dout, add_v(g), add_v(be)))

    Wz, bz = params["fc_z"]
    roff, coff = place("fc_z", Wz, transpose=True)        # stored [Q, 512]
    fcz_meta = (roff, coff, Wz.shape[0], Wz.shape[1], add_v(bz))

    Wd, bd = params["dec_in"]
    roff, coff = place("dec_in", Wd)
    dec_in_meta = (roff, coff, Wd.shape[0], Wd.shape[1], add_v(bd))

    dec_meta = []
    for i, (W, _b, g, be) in enumerate(params["dec"]):    # bias dropped (pre-BN)
        din, dout = W.shape
        roff, coff = place(f"dec{i}", W)
        dec_meta.append((roff, coff, din, dout, add_v(g), add_v(be)))

    Wf, bf = params["final"]
    roff, coff = place("final", Wf)
    final_meta = (roff, coff, Wf.shape[0], Wf.shape[1], add_v(bf))

    # Assemble the slabs (with an overlap guard on the hand-written layout).
    w_np = np.zeros((SLAB_ROWS, SLAB_COLS), np.float32)
    occupied = np.zeros((SLAB_ROWS, SLAB_COLS), bool)
    for roff, coff, Ws in w_blocks:
        nrow, ncol = Ws.shape
        assert not occupied[roff:roff + nrow, coff:coff + ncol].any(), \
            "weight slab layout overlap"
        occupied[roff:roff + nrow, coff:coff + ncol] = True
        w_np[roff:roff + nrow, coff:coff + ncol] = Ws
    w_slab = jnp.asarray(w_np, jnp.bfloat16)

    v_np = np.zeros((len(v_rows), SLAB_COLS), np.float32)
    for r, vec in enumerate(v_rows):
        v_np[r, :vec.shape[0]] = vec
    v_slab = jnp.asarray(v_np, jnp.float32)

    meta = dict(enc_meta=tuple(enc_meta), fcz_meta=fcz_meta,
                dec_in_meta=dec_in_meta, dec_meta=tuple(dec_meta),
                final_meta=final_meta)
    return w_slab, v_slab, meta


def categorical_vae_forward(action, context, u, w_slab, v_slab, meta, temp):
    """Returns (recon, action, q) exactly like CategoricalVAE.forward."""
    B, A = action.shape
    C = context.shape[1]
    Q = u.shape[1]
    # One packed activation input: action | context | gumbel-uniform noise.
    acts = jnp.concatenate([action, context, u], axis=1)

    kernel = functools.partial(_vae_kernel, dims=(A, C, Q), temp=temp, **meta)
    vmem = pl.BlockSpec(memory_space=pltpu.MemorySpace.VMEM)

    packed = pl.pallas_call(
        kernel,
        out_shape=jax.ShapeDtypeStruct((B, OUT_WIDTH), jnp.float32),
        in_specs=[vmem, vmem, vmem],
        out_specs=vmem,
    )(acts, w_slab, v_slab)

    recon = packed[:, :A]
    q = packed[:, A:A + Q]
    return recon, action, q


def _reference_forward(action, context, u, w_slab, v_slab, meta, temp):
    """Pure-JAX mirror of the kernel math (same packing / bf16 casts)."""
    def wmat(roff, coff, nrow, ncol):
        return w_slab[roff:roff + nrow, coff:coff + ncol]

    def vrow(row, dim):
        return v_slab[row:row + 1, :dim]

    def dense_bn(x, roff, coff, din, dout, grow, brow):
        h = jnp.dot(x.astype(jnp.bfloat16), wmat(roff, coff, din, dout),
                    preferred_element_type=jnp.float32)
        return _bn_leaky(h, vrow(grow, dout), vrow(brow, dout))

    x = jnp.concatenate([action, context], axis=1)
    for m in meta["enc_meta"]:
        x = dense_bn(x, *m)

    roff, coff, din, dout, brow = meta["fcz_meta"]
    w_zt = wmat(roff, coff, dout, din)
    q = jax.lax.dot_general(
        x.astype(jnp.bfloat16), w_zt,
        dimension_numbers=(((1,), (1,)), ((), ())),
        preferred_element_type=jnp.float32) + vrow(brow, dout)

    g = -jnp.log(-jnp.log(u + GUMBEL_EPS) + GUMBEL_EPS)
    s = jax.nn.softmax((q + g) / temp, axis=-1)

    roff, coff, din, dout, brow = meta["dec_in_meta"]
    zc = jnp.concatenate([s, context], axis=-1)
    x = jnp.dot(zc.astype(jnp.bfloat16), wmat(roff, coff, din, dout),
                preferred_element_type=jnp.float32) + vrow(brow, dout)

    for m in meta["dec_meta"]:
        x = dense_bn(x, *m)

    roff, coff, din, dout, brow = meta["final_meta"]
    recon = jnp.dot(x.astype(jnp.bfloat16), wmat(roff, coff, din, dout),
                    preferred_element_type=jnp.float32) + vrow(brow, dout)
    return recon, q


if __name__ == "__main__":
    key = jax.random.PRNGKey(0)
    k_act, k_ctx, k_u, k_params = jax.random.split(key, 4)

    B = 8
    action = jax.random.normal(k_act, (B, ACTION_DIM), jnp.float32)
    context = jax.random.normal(k_ctx, (B, CONTEXT_DIM), jnp.float32)
    u = jax.random.uniform(k_u, (B, CATEGORICAL_DIM), jnp.float32)

    params = init_params(k_params, ACTION_DIM, CONTEXT_DIM,
                         CATEGORICAL_DIM, HIDDEN_DIMS)
    w_slab, v_slab, meta = pack_params(params)

    recon, act_out, q = categorical_vae_forward(
        action, context, u, w_slab, v_slab, meta, TEMPERATURE)
    jax.block_until_ready((recon, act_out, q))

    assert recon.shape == (B, ACTION_DIM)
    assert act_out.shape == (B, ACTION_DIM)
    assert q.shape == (B, CATEGORICAL_DIM)
    assert bool(jnp.all(jnp.isfinite(recon))) and bool(jnp.all(jnp.isfinite(q)))

    recon_ref, q_ref = _reference_forward(action, context, u, w_slab, v_slab,
                                          meta, TEMPERATURE)
    assert bool(jnp.allclose(q, q_ref, rtol=2e-2, atol=2e-2))
    assert bool(jnp.allclose(recon, recon_ref, rtol=2e-2, atol=2e-2))

    print("KERNEL_OK")
</pallas_src>

<mosaic_0001>
module attributes {stable_mosaic.version = 11 : i64} {
  func.func @_vae_kernel(%arg0: memref<8x20xf32, #tpu.memory_space<vmem>>, %arg1: memref<784x512xbf16, #tpu.memory_space<vmem>>, %arg2: memref<21x512xf32, #tpu.memory_space<vmem>>, %arg3: memref<8x128xf32, #tpu.memory_space<vmem>>) attributes {dimension_semantics = [], scalar_prefetch = 0 : i64, scratch_operands = 0 : i64, tpu.core_type = #tpu.core_type<tc>} {
    %c0 = arith.constant 0 : index
    %c0_0 = arith.constant 0 : index
    %0 = vector.load %arg0[%c0, %c0_0] : memref<8x20xf32, #tpu.memory_space<vmem>>, vector<8x20xf32>
    %1 = vector.extract_strided_slice %0 {offsets = [0, 0], sizes = [8, 16], strides = [1, 1]} : vector<8x20xf32> to vector<8x16xf32>
    %2 = vector.extract_strided_slice %0 {offsets = [0, 8], sizes = [8, 8], strides = [1, 1]} : vector<8x20xf32> to vector<8x8xf32>
    %3 = vector.extract_strided_slice %0 {offsets = [0, 16], sizes = [8, 4], strides = [1, 1]} : vector<8x20xf32> to vector<8x4xf32>
    %4 = arith.truncf %1 : vector<8x16xf32> to vector<8x16xbf16>
    %c608 = arith.constant 608 : index
    %c384 = arith.constant 384 : index
    %5 = vector.load %arg1[%c608, %c384] : memref<784x512xbf16, #tpu.memory_space<vmem>>, vector<16x32xbf16>
    %cst = arith.constant dense<0.000000e+00> : vector<8x32xf32>
    %6 = tpu.matmul %4, %5, %cst {dimension_numbers = #tpu.dot_dimension_numbers<[1], [0], [0], [1], [0, 0, 1, 1], [], []>} : vector<8x16xbf16>, vector<16x32xbf16>, vector<8x32xf32> -> vector<8x32xf32>
    %c0_1 = arith.constant 0 : index
    %c0_2 = arith.constant 0 : index
    %7 = vector.load %arg2[%c0_1, %c0_2] : memref<21x512xf32, #tpu.memory_space<vmem>>, vector<1x32xf32>
    %c1 = arith.constant 1 : index
    %c0_3 = arith.constant 0 : index
    %8 = vector.load %arg2[%c1, %c0_3] : memref<21x512xf32, #tpu.memory_space<vmem>>, vector<1x32xf32>
    %cst_4 = arith.constant dense<0.000000e+00> : vector<32xf32>
    %9 = vector.multi_reduction <add>, %6, %cst_4 [0] : vector<8x32xf32> to vector<32xf32>
    %10 = vector.shape_cast %9 : vector<32xf32> to vector<1x32xf32>
    %cst_5 = arith.constant 8.000000e+00 : f32
    %11 = vector.broadcast %cst_5 : f32 to vector<1x32xf32>
    %12 = arith.divf %10, %11 : vector<1x32xf32>
    %13 = vector.broadcast %12 : vector<1x32xf32> to vector<8x32xf32>
    %14 = arith.subf %6, %13 : vector<8x32xf32>
    %15 = arith.mulf %14, %14 : vector<8x32xf32>
    %cst_6 = arith.constant dense<0.000000e+00> : vector<32xf32>
    %16 = vector.multi_reduction <add>, %15, %cst_6 [0] : vector<8x32xf32> to vector<32xf32>
    %17 = vector.shape_cast %16 : vector<32xf32> to vector<1x32xf32>
    %cst_7 = arith.constant 8.000000e+00 : f32
    %18 = vector.broadcast %cst_7 : f32 to vector<1x32xf32>
    %19 = arith.divf %17, %18 : vector<1x32xf32>
    %cst_8 = arith.constant 9.99999974E-6 : f32
    %20 = vector.broadcast %cst_8 : f32 to vector<1x32xf32>
    %21 = arith.addf %19, %20 : vector<1x32xf32>
    %22 = math.rsqrt %21 : vector<1x32xf32>
    %23 = vector.broadcast %22 : vector<1x32xf32> to vector<8x32xf32>
    %24 = arith.mulf %14, %23 : vector<8x32xf32>
    %25 = vector.broadcast %7 : vector<1x32xf32> to vector<8x32xf32>
    %26 = arith.mulf %24, %25 : vector<8x32xf32>
    %27 = vector.broadcast %8 : vector<1x32xf32> to vector<8x32xf32>
    %28 = arith.addf %26, %27 : vector<8x32xf32>
    %cst_9 = arith.constant 0.000000e+00 : f32
    %29 = vector.broadcast %cst_9 : f32 to vector<8x32xf32>
    %30 = arith.cmpf oge, %28, %29 : vector<8x32xf32>
    %cst_10 = arith.constant 0.00999999977 : f32
    %31 = vector.broadcast %cst_10 : f32 to vector<8x32xf32>
    %32 = arith.mulf %31, %28 : vector<8x32xf32>
    %33 = arith.select %30, %28, %32 : vector<8x32xi1>, vector<8x32xf32>
    %34 = arith.truncf %33 : vector<8x32xf32> to vector<8x32xbf16>
    %c576 = arith.constant 576 : index
    %c384_11 = arith.constant 384 : index
    %35 = vector.load %arg1[%c576, %c384_11] : memref<784x512xbf16, #tpu.memory_space<vmem>>, vector<32x64xbf16>
    %cst_12 = arith.constant dense<0.000000e+00> : vector<8x64xf32>
    %36 = tpu.matmul %34, %35, %cst_12 {dimension_numbers = #tpu.dot_dimension_numbers<[1], [0], [0], [1], [0, 0, 1, 1], [], []>} : vector<8x32xbf16>, vector<32x64xbf16>, vector<8x64xf32> -> vector<8x64xf32>
    %c2 = arith.constant 2 : index
    %c0_13 = arith.constant 0 : index
    %37 = vector.load %arg2[%c2, %c0_13] : memref<21x512xf32, #tpu.memory_space<vmem>>, vector<1x64xf32>
    %c3 = arith.constant 3 : index
    %c0_14 = arith.constant 0 : index
    %38 = vector.load %arg2[%c3, %c0_14] : memref<21x512xf32, #tpu.memory_space<vmem>>, vector<1x64xf32>
    %cst_15 = arith.constant dense<0.000000e+00> : vector<64xf32>
    %39 = vector.multi_reduction <add>, %36, %cst_15 [0] : vector<8x64xf32> to vector<64xf32>
    %40 = vector.shape_cast %39 : vector<64xf32> to vector<1x64xf32>
    %cst_16 = arith.constant 8.000000e+00 : f32
    %41 = vector.broadcast %cst_16 : f32 to vector<1x64xf32>
    %42 = arith.divf %40, %41 : vector<1x64xf32>
    %43 = vector.broadcast %42 : vector<1x64xf32> to vector<8x64xf32>
    %44 = arith.subf %36, %43 : vector<8x64xf32>
    %45 = arith.mulf %44, %44 : vector<8x64xf32>
    %cst_17 = arith.constant dense<0.000000e+00> : vector<64xf32>
    %46 = vector.multi_reduction <add>, %45, %cst_17 [0] : vector<8x64xf32> to vector<64xf32>
    %47 = vector.shape_cast %46 : vector<64xf32> to vector<1x64xf32>
    %cst_18 = arith.constant 8.000000e+00 : f32
    %48 = vector.broadcast %cst_18 : f32 to vector<1x64xf32>
    %49 = arith.divf %47, %48 : vector<1x64xf32>
    %cst_19 = arith.constant 9.99999974E-6 : f32
    %50 = vector.broadcast %cst_19 : f32 to vector<1x64xf32>
    %51 = arith.addf %49, %50 : vector<1x64xf32>
    %52 = math.rsqrt %51 : vector<1x64xf32>
    %53 = vector.broadcast %52 : vector<1x64xf32> to vector<8x64xf32>
    %54 = arith.mulf %44, %53 : vector<8x64xf32>
    %55 = vector.broadcast %37 : vector<1x64xf32> to vector<8x64xf32>
    %56 = arith.mulf %54, %55 : vector<8x64xf32>
    %57 = vector.broadcast %38 : vector<1x64xf32> to vector<8x64xf32>
    %58 = arith.addf %56, %57 : vector<8x64xf32>
    %cst_20 = arith.constant 0.000000e+00 : f32
    %59 = vector.broadcast %cst_20 : f32 to vector<8x64xf32>
    %60 = arith.cmpf oge, %58, %59 : vector<8x64xf32>
    %cst_21 = arith.constant 0.00999999977 : f32
    %61 = vector.broadcast %cst_21 : f32 to vector<8x64xf32>
    %62 = arith.mulf %61, %58 : vector<8x64xf32>
    %63 = arith.select %60, %58, %62 : vector<8x64xi1>, vector<8x64xf32>
    %64 = arith.truncf %63 : vector<8x64xf32> to vector<8x64xbf16>
    %c640 = arith.constant 640 : index
    %c256 = arith.constant 256 : index
    %65 = vector.load %arg1[%c640, %c256] : memref<784x512xbf16, #tpu.memory_space<vmem>>, vector<64x128xbf16>
    %cst_22 = arith.constant dense<0.000000e+00> : vector<8x128xf32>
    %66 = tpu.matmul %64, %65, %cst_22 {dimension_numbers = #tpu.dot_dimension_numbers<[1], [0], [0], [1], [0, 0, 1, 1], [], []>} : vector<8x64xbf16>, vector<64x128xbf16>, vector<8x128xf32> -> vector<8x128xf32>
    %c4 = arith.constant 4 : index
    %c0_23 = arith.constant 0 : index
    %67 = vector.load %arg2[%c4, %c0_23] : memref<21x512xf32, #tpu.memory_space<vmem>>, vector<1x128xf32>
    %c5 = arith.constant 5 : index
    %c0_24 = arith.constant 0 : index
    %68 = vector.load %arg2[%c5, %c0_24] : memref<21x512xf32, #tpu.memory_space<vmem>>, vector<1x128xf32>
    %cst_25 = arith.constant dense<0.000000e+00> : vector<128xf32>
    %69 = vector.multi_reduction <add>, %66, %cst_25 [0] : vector<8x128xf32> to vector<128xf32>
    %70 = vector.shape_cast %69 : vector<128xf32> to vector<1x128xf32>
    %cst_26 = arith.constant 8.000000e+00 : f32
    %71 = vector.broadcast %cst_26 : f32 to vector<1x128xf32>
    %72 = arith.divf %70, %71 : vector<1x128xf32>
    %73 = vector.broadcast %72 : vector<1x128xf32> to vector<8x128xf32>
    %74 = arith.subf %66, %73 : vector<8x128xf32>
    %75 = arith.mulf %74, %74 : vector<8x128xf32>
    %cst_27 = arith.constant dense<0.000000e+00> : vector<128xf32>
    %76 = vector.multi_reduction <add>, %75, %cst_27 [0] : vector<8x128xf32> to vector<128xf32>
    %77 = vector.shape_cast %76 : vector<128xf32> to vector<1x128xf32>
    %cst_28 = arith.constant 8.000000e+00 : f32
    %78 = vector.broadcast %cst_28 : f32 to vector<1x128xf32>
    %79 = arith.divf %77, %78 : vector<1x128xf32>
    %cst_29 = arith.constant 9.99999974E-6 : f32
    %80 = vector.broadcast %cst_29 : f32 to vector<1x128xf32>
    %81 = arith.addf %79, %80 : vector<1x128xf32>
    %82 = math.rsqrt %81 : vector<1x128xf32>
    %83 = vector.broadcast %82 : vector<1x128xf32> to vector<8x128xf32>
    %84 = arith.mulf %74, %83 : vector<8x128xf32>
    %85 = vector.broadcast %67 : vector<1x128xf32> to vector<8x128xf32>
    %86 = arith.mulf %84, %85 : vector<8x128xf32>
    %87 = vector.broadcast %68 : vector<1x128xf32> to vector<8x128xf32>
    %88 = arith.addf %86, %87 : vector<8x128xf32>
    %cst_30 = arith.constant 0.000000e+00 : f32
    %89 = vector.broadcast %cst_30 : f32 to vector<8x128xf32>
    %90 = arith.cmpf oge, %88, %89 : vector<8x128xf32>
    %cst_31 = arith.constant 0.00999999977 : f32
    %91 = vector.broadcast %cst_31 : f32 to vector<8x128xf32>
    %92 = arith.mulf %91, %88 : vector<8x128xf32>
    %93 = arith.select %90, %88, %92 : vector<8x128xi1>, vector<8x128xf32>
    %94 = arith.truncf %93 : vector<8x128xf32> to vector<8x128xbf16>
    %c256_32 = arith.constant 256 : index
    %c256_33 = arith.constant 256 : index
    %95 = vector.load %arg1[%c256_32, %c256_33] : memref<784x512xbf16, #tpu.memory_space<vmem>>, vector<128x256xbf16>
    %cst_34 = arith.constant dense<0.000000e+00> : vector<8x256xf32>
    %96 = tpu.matmul %94, %95, %cst_34 {dimension_numbers = #tpu.dot_dimension_numbers<[1], [0], [0], [1], [0, 0, 1, 1], [], []>} : vector<8x128xbf16>, vector<128x256xbf16>, vector<8x256xf32> -> vector<8x256xf32>
    %c6 = arith.constant 6 : index
    %c0_35 = arith.constant 0 : index
    %97 = vector.load %arg2[%c6, %c0_35] : memref<21x512xf32, #tpu.memory_space<vmem>>, vector<1x256xf32>
    %c7 = arith.constant 7 : index
    %c0_36 = arith.constant 0 : index
    %98 = vector.load %arg2[%c7, %c0_36] : memref<21x512xf32, #tpu.memory_space<vmem>>, vector<1x256xf32>
    %cst_37 = arith.constant dense<0.000000e+00> : vector<256xf32>
    %99 = vector.multi_reduction <add>, %96, %cst_37 [0] : vector<8x256xf32> to vector<256xf32>
    %100 = vector.shape_cast %99 : vector<256xf32> to vector<1x256xf32>
    %cst_38 = arith.constant 8.000000e+00 : f32
    %101 = vector.broadcast %cst_38 : f32 to vector<1x256xf32>
    %102 = arith.divf %100, %101 : vector<1x256xf32>
    %103 = vector.broadcast %102 : vector<1x256xf32> to vector<8x256xf32>
    %104 = arith.subf %96, %103 : vector<8x256xf32>
    %105 = arith.mulf %104, %104 : vector<8x256xf32>
    %cst_39 = arith.constant dense<0.000000e+00> : vector<256xf32>
    %106 = vector.multi_reduction <add>, %105, %cst_39 [0] : vector<8x256xf32> to vector<256xf32>
    %107 = vector.shape_cast %106 : vector<256xf32> to vector<1x256xf32>
    %cst_40 = arith.constant 8.000000e+00 : f32
    %108 = vector.broadcast %cst_40 : f32 to vector<1x256xf32>
    %109 = arith.divf %107, %108 : vector<1x256xf32>
    %cst_41 = arith.constant 9.99999974E-6 : f32
    %110 = vector.broadcast %cst_41 : f32 to vector<1x256xf32>
    %111 = arith.addf %109, %110 : vector<1x256xf32>
    %112 = math.rsqrt %111 : vector<1x256xf32>
    %113 = vector.broadcast %112 : vector<1x256xf32> to vector<8x256xf32>
    %114 = arith.mulf %104, %113 : vector<8x256xf32>
    %115 = vector.broadcast %97 : vector<1x256xf32> to vector<8x256xf32>
    %116 = arith.mulf %114, %115 : vector<8x256xf32>
    %117 = vector.broadcast %98 : vector<1x256xf32> to vector<8x256xf32>
    %118 = arith.addf %116, %117 : vector<8x256xf32>
    %cst_42 = arith.constant 0.000000e+00 : f32
    %119 = vector.broadcast %cst_42 : f32 to vector<8x256xf32>
    %120 = arith.cmpf oge, %118, %119 : vector<8x256xf32>
    %cst_43 = arith.constant 0.00999999977 : f32
    %121 = vector.broadcast %cst_43 : f32 to vector<8x256xf32>
    %122 = arith.mulf %121, %118 : vector<8x256xf32>
    %123 = arith.select %120, %118, %122 : vector<8x256xi1>, vector<8x256xf32>
    %124 = arith.truncf %123 : vector<8x256xf32> to vector<8x256xbf16>
    %c0_44 = arith.constant 0 : index
    %c0_45 = arith.constant 0 : index
    %125 = vector.load %arg1[%c0_44, %c0_45] : memref<784x512xbf16, #tpu.memory_space<vmem>>, vector<256x512xbf16>
    %cst_46 = arith.constant dense<0.000000e+00> : vector<8x512xf32>
    %126 = tpu.matmul %124, %125, %cst_46 {dimension_numbers = #tpu.dot_dimension_numbers<[1], [0], [0], [1], [0, 0, 1, 1], [], []>} : vector<8x256xbf16>, vector<256x512xbf16>, vector<8x512xf32> -> vector<8x512xf32>
    %c8 = arith.constant 8 : index
    %c0_47 = arith.constant 0 : index
    %127 = vector.load %arg2[%c8, %c0_47] : memref<21x512xf32, #tpu.memory_space<vmem>>, vector<1x512xf32>
    %c9 = arith.constant 9 : index
    %c0_48 = arith.constant 0 : index
    %128 = vector.load %arg2[%c9, %c0_48] : memref<21x512xf32, #tpu.memory_space<vmem>>, vector<1x512xf32>
    %cst_49 = arith.constant dense<0.000000e+00> : vector<512xf32>
    %129 = vector.multi_reduction <add>, %126, %cst_49 [0] : vector<8x512xf32> to vector<512xf32>
    %130 = vector.shape_cast %129 : vector<512xf32> to vector<1x512xf32>
    %cst_50 = arith.constant 8.000000e+00 : f32
    %131 = vector.broadcast %cst_50 : f32 to vector<1x512xf32>
    %132 = arith.divf %130, %131 : vector<1x512xf32>
    %133 = vector.broadcast %132 : vector<1x512xf32> to vector<8x512xf32>
    %134 = arith.subf %126, %133 : vector<8x512xf32>
    %135 = arith.mulf %134, %134 : vector<8x512xf32>
    %cst_51 = arith.constant dense<0.000000e+00> : vector<512xf32>
    %136 = vector.multi_reduction <add>, %135, %cst_51 [0] : vector<8x512xf32> to vector<512xf32>
    %137 = vector.shape_cast %136 : vector<512xf32> to vector<1x512xf32>
    %cst_52 = arith.constant 8.000000e+00 : f32
    %138 = vector.broadcast %cst_52 : f32 to vector<1x512xf32>
    %139 = arith.divf %137, %138 : vector<1x512xf32>
    %cst_53 = arith.constant 9.99999974E-6 : f32
    %140 = vector.broadcast %cst_53 : f32 to vector<1x512xf32>
    %141 = arith.addf %139, %140 : vector<1x512xf32>
    %142 = math.rsqrt %141 : vector<1x512xf32>
    %143 = vector.broadcast %142 : vector<1x512xf32> to vector<8x512xf32>
    %144 = arith.mulf %134, %143 : vector<8x512xf32>
    %145 = vector.broadcast %127 : vector<1x512xf32> to vector<8x512xf32>
    %146 = arith.mulf %144, %145 : vector<8x512xf32>
    %147 = vector.broadcast %128 : vector<1x512xf32> to vector<8x512xf32>
    %148 = arith.addf %146, %147 : vector<8x512xf32>
    %cst_54 = arith.constant 0.000000e+00 : f32
    %149 = vector.broadcast %cst_54 : f32 to vector<8x512xf32>
    %150 = arith.cmpf oge, %148, %149 : vector<8x512xf32>
    %cst_55 = arith.constant 0.00999999977 : f32
    %151 = vector.broadcast %cst_55 : f32 to vector<8x512xf32>
    %152 = arith.mulf %151, %148 : vector<8x512xf32>
    %153 = arith.select %150, %148, %152 : vector<8x512xi1>, vector<8x512xf32>
    %c768 = arith.constant 768 : index
    %c0_56 = arith.constant 0 : index
    %154 = vector.load %arg1[%c768, %c0_56] : memref<784x512xbf16, #tpu.memory_space<vmem>>, vector<4x512xbf16>
    %155 = arith.truncf %153 : vector<8x512xf32> to vector<8x512xbf16>
    %cst_57 = arith.constant dense<0.000000e+00> : vector<8x4xf32>
    %156 = tpu.matmul %155, %154, %cst_57 {dimension_numbers = #tpu.dot_dimension_numbers<[1], [1], [0], [0], [0, 0, 1, 0], [], []>} : vector<8x512xbf16>, vector<4x512xbf16>, vector<8x4xf32> -> vector<8x4xf32>
    %c10 = arith.constant 10 : index
    %c0_58 = arith.constant 0 : index
    %157 = vector.load %arg2[%c10, %c0_58] : memref<21x512xf32, #tpu.memory_space<vmem>>, vector<1x4xf32>
    %158 = vector.broadcast %157 : vector<1x4xf32> to vector<8x4xf32>
    %159 = arith.addf %156, %158 : vector<8x4xf32>
    %cst_59 = arith.constant 1.000000e-07 : f32
    %160 = vector.broadcast %cst_59 : f32 to vector<8x4xf32>
    %161 = arith.addf %3, %160 : vector<8x4xf32>
    %162 = math.log %161 : vector<8x4xf32>
    %cst_60 = arith.constant 0.000000e+00 : f32
    %163 = vector.broadcast %cst_60 : f32 to vector<8x4xf32>
    %164 = arith.subf %163, %162 : vector<8x4xf32>
    %cst_61 = arith.constant 1.000000e-07 : f32
    %165 = vector.broadcast %cst_61 : f32 to vector<8x4xf32>
    %166 = arith.addf %164, %165 : vector<8x4xf32>
    %167 = math.log %166 : vector<8x4xf32>
    %cst_62 = arith.constant 0.000000e+00 : f32
    %168 = vector.broadcast %cst_62 : f32 to vector<8x4xf32>
    %169 = arith.subf %168, %167 : vector<8x4xf32>
    %170 = arith.addf %159, %169 : vector<8x4xf32>
    %cst_63 = arith.constant 2.000000e+00 : f32
    %171 = vector.broadcast %cst_63 : f32 to vector<8x4xf32>
    %172 = arith.mulf %170, %171 : vector<8x4xf32>
    %cst_64 = arith.constant dense<0xFF800000> : vector<8xf32>
    %173 = vector.multi_reduction <maximumf>, %172, %cst_64 [1] : vector<8x4xf32> to vector<8xf32>
    %174 = vector.shape_cast %173 : vector<8xf32> to vector<8x1xf32>
    %175 = vector.broadcast %174 : vector<8x1xf32> to vector<8x4xf32>
    %176 = arith.subf %172, %175 : vector<8x4xf32>
    %177 = math.exp %176 : vector<8x4xf32>
    %cst_65 = arith.constant dense<0.000000e+00> : vector<8xf32>
    %178 = vector.multi_reduction <add>, %177, %cst_65 [1] : vector<8x4xf32> to vector<8xf32>
    %179 = vector.shape_cast %178 : vector<8xf32> to vector<8x1xf32>
    %180 = vector.broadcast %179 : vector<8x1xf32> to vector<8x4xf32>
    %181 = arith.divf %177, %180 : vector<8x4xf32>
    %182 = tpu.concatenate %181, %2 in 1 : vector<8x4xf32>, vector<8x8xf32> -> vector<8x12xf32>
    %183 = arith.truncf %182 : vector<8x12xf32> to vector<8x12xbf16>
    %c772 = arith.constant 772 : index
    %c0_66 = arith.constant 0 : index
    %184 = vector.load %arg1[%c772, %c0_66] : memref<784x512xbf16, #tpu.memory_space<vmem>>, vector<12x512xbf16>
    %cst_67 = arith.constant dense<0.000000e+00> : vector<8x512xf32>
    %185 = tpu.matmul %183, %184, %cst_67 {dimension_numbers = #tpu.dot_dimension_numbers<[1], [0], [0], [1], [0, 0, 1, 1], [], []>} : vector<8x12xbf16>, vector<12x512xbf16>, vector<8x512xf32> -> vector<8x512xf32>
    %c11 = arith.constant 11 : index
    %c0_68 = arith.constant 0 : index
    %186 = vector.load %arg2[%c11, %c0_68] : memref<21x512xf32, #tpu.memory_space<vmem>>, vector<1x512xf32>
    %187 = vector.broadcast %186 : vector<1x512xf32> to vector<8x512xf32>
    %188 = arith.addf %185, %187 : vector<8x512xf32>
    %189 = arith.truncf %188 : vector<8x512xf32> to vector<8x512xbf16>
    %c256_69 = arith.constant 256 : index
    %c0_70 = arith.constant 0 : index
    %190 = vector.load %arg1[%c256_69, %c0_70] : memref<784x512xbf16, #tpu.memory_space<vmem>>, vector<512x256xbf16>
    %cst_71 = arith.constant dense<0.000000e+00> : vector<8x256xf32>
    %191 = tpu.matmul %189, %190, %cst_71 {dimension_numbers = #tpu.dot_dimension_numbers<[1], [0], [0], [1], [0, 0, 1, 1], [], []>} : vector<8x512xbf16>, vector<512x256xbf16>, vector<8x256xf32> -> vector<8x256xf32>
    %c12 = arith.constant 12 : index
    %c0_72 = arith.constant 0 : index
    %192 = vector.load %arg2[%c12, %c0_72] : memref<21x512xf32, #tpu.memory_space<vmem>>, vector<1x256xf32>
    %c13 = arith.constant 13 : index
    %c0_73 = arith.constant 0 : index
    %193 = vector.load %arg2[%c13, %c0_73] : memref<21x512xf32, #tpu.memory_space<vmem>>, vector<1x256xf32>
    %cst_74 = arith.constant dense<0.000000e+00> : vector<256xf32>
    %194 = vector.multi_reduction <add>, %191, %cst_74 [0] : vector<8x256xf32> to vector<256xf32>
    %195 = vector.shape_cast %194 : vector<256xf32> to vector<1x256xf32>
    %cst_75 = arith.constant 8.000000e+00 : f32
    %196 = vector.broadcast %cst_75 : f32 to vector<1x256xf32>
    %197 = arith.divf %195, %196 : vector<1x256xf32>
    %198 = vector.broadcast %197 : vector<1x256xf32> to vector<8x256xf32>
    %199 = arith.subf %191, %198 : vector<8x256xf32>
    %200 = arith.mulf %199, %199 : vector<8x256xf32>
    %cst_76 = arith.constant dense<0.000000e+00> : vector<256xf32>
    %201 = vector.multi_reduction <add>, %200, %cst_76 [0] : vector<8x256xf32> to vector<256xf32>
    %202 = vector.shape_cast %201 : vector<256xf32> to vector<1x256xf32>
    %cst_77 = arith.constant 8.000000e+00 : f32
    %203 = vector.broadcast %cst_77 : f32 to vector<1x256xf32>
    %204 = arith.divf %202, %203 : vector<1x256xf32>
    %cst_78 = arith.constant 9.99999974E-6 : f32
    %205 = vector.broadcast %cst_78 : f32 to vector<1x256xf32>
    %206 = arith.addf %204, %205 : vector<1x256xf32>
    %207 = math.rsqrt %206 : vector<1x256xf32>
    %208 = vector.broadcast %207 : vector<1x256xf32> to vector<8x256xf32>
    %209 = arith.mulf %199, %208 : vector<8x256xf32>
    %210 = vector.broadcast %192 : vector<1x256xf32> to vector<8x256xf32>
    %211 = arith.mulf %209, %210 : vector<8x256xf32>
    %212 = vector.broadcast %193 : vector<1x256xf32> to vector<8x256xf32>
    %213 = arith.addf %211, %212 : vector<8x256xf32>
    %cst_79 = arith.constant 0.000000e+00 : f32
    %214 = vector.broadcast %cst_79 : f32 to vector<8x256xf32>
    %215 = arith.cmpf oge, %213, %214 : vector<8x256xf32>
    %cst_80 = arith.constant 0.00999999977 : f32
    %216 = vector.broadcast %cst_80 : f32 to vector<8x256xf32>
    %217 = arith.mulf %216, %213 : vector<8x256xf32>
    %218 = arith.select %215, %213, %217 : vector<8x256xi1>, vector<8x256xf32>
    %219 = arith.truncf %218 : vector<8x256xf32> to vector<8x256xbf16>
    %c384_81 = arith.constant 384 : index
    %c256_82 = arith.constant 256 : index
    %220 = vector.load %arg1[%c384_81, %c256_82] : memref<784x512xbf16, #tpu.memory_space<vmem>>, vector<256x128xbf16>
    %cst_83 = arith.constant dense<0.000000e+00> : vector<8x128xf32>
    %221 = tpu.matmul %219, %220, %cst_83 {dimension_numbers = #tpu.dot_dimension_numbers<[1], [0], [0], [1], [0, 0, 1, 1], [], []>} : vector<8x256xbf16>, vector<256x128xbf16>, vector<8x128xf32> -> vector<8x128xf32>
    %c14 = arith.constant 14 : index
    %c0_84 = arith.constant 0 : index
    %222 = vector.load %arg2[%c14, %c0_84] : memref<21x512xf32, #tpu.memory_space<vmem>>, vector<1x128xf32>
    %c15 = arith.constant 15 : index
    %c0_85 = arith.constant 0 : index
    %223 = vector.load %arg2[%c15, %c0_85] : memref<21x512xf32, #tpu.memory_space<vmem>>, vector<1x128xf32>
    %cst_86 = arith.constant dense<0.000000e+00> : vector<128xf32>
    %224 = vector.multi_reduction <add>, %221, %cst_86 [0] : vector<8x128xf32> to vector<128xf32>
    %225 = vector.shape_cast %224 : vector<128xf32> to vector<1x128xf32>
    %cst_87 = arith.constant 8.000000e+00 : f32
    %226 = vector.broadcast %cst_87 : f32 to vector<1x128xf32>
    %227 = arith.divf %225, %226 : vector<1x128xf32>
    %228 = vector.broadcast %227 : vector<1x128xf32> to vector<8x128xf32>
    %229 = arith.subf %221, %228 : vector<8x128xf32>
    %230 = arith.mulf %229, %229 : vector<8x128xf32>
    %cst_88 = arith.constant dense<0.000000e+00> : vector<128xf32>
    %231 = vector.multi_reduction <add>, %230, %cst_88 [0] : vector<8x128xf32> to vector<128xf32>
    %232 = vector.shape_cast %231 : vector<128xf32> to vector<1x128xf32>
    %cst_89 = arith.constant 8.000000e+00 : f32
    %233 = vector.broadcast %cst_89 : f32 to vector<1x128xf32>
    %234 = arith.divf %232, %233 : vector<1x128xf32>
    %cst_90 = arith.constant 9.99999974E-6 : f32
    %235 = vector.broadcast %cst_90 : f32 to vector<1x128xf32>
    %236 = arith.addf %234, %235 : vector<1x128xf32>
    %237 = math.rsqrt %236 : vector<1x128xf32>
    %238 = vector.broadcast %237 : vector<1x128xf32> to vector<8x128xf32>
    %239 = arith.mulf %229, %238 : vector<8x128xf32>
    %240 = vector.broadcast %222 : vector<1x128xf32> to vector<8x128xf32>
    %241 = arith.mulf %239, %240 : vector<8x128xf32>
    %242 = vector.broadcast %223 : vector<1x128xf32> to vector<8x128xf32>
    %243 = arith.addf %241, %242 : vector<8x128xf32>
    %cst_91 = arith.constant 0.000000e+00 : f32
    %244 = vector.broadcast %cst_91 : f32 to vector<8x128xf32>
    %245 = arith.cmpf oge, %243, %244 : vector<8x128xf32>
    %cst_92 = arith.constant 0.00999999977 : f32
    %246 = vector.broadcast %cst_92 : f32 to vector<8x128xf32>
    %247 = arith.mulf %246, %243 : vector<8x128xf32>
    %248 = arith.select %245, %243, %247 : vector<8x128xi1>, vector<8x128xf32>
    %249 = arith.truncf %248 : vector<8x128xf32> to vector<8x128xbf16>
    %c384_93 = arith.constant 384 : index
    %c384_94 = arith.constant 384 : index
    %250 = vector.load %arg1[%c384_93, %c384_94] : memref<784x512xbf16, #tpu.memory_space<vmem>>, vector<128x64xbf16>
    %cst_95 = arith.constant dense<0.000000e+00> : vector<8x64xf32>
    %251 = tpu.matmul %249, %250, %cst_95 {dimension_numbers = #tpu.dot_dimension_numbers<[1], [0], [0], [1], [0, 0, 1, 1], [], []>} : vector<8x128xbf16>, vector<128x64xbf16>, vector<8x64xf32> -> vector<8x64xf32>
    %c16 = arith.constant 16 : index
    %c0_96 = arith.constant 0 : index
    %252 = vector.load %arg2[%c16, %c0_96] : memref<21x512xf32, #tpu.memory_space<vmem>>, vector<1x64xf32>
    %c17 = arith.constant 17 : index
    %c0_97 = arith.constant 0 : index
    %253 = vector.load %arg2[%c17, %c0_97] : memref<21x512xf32, #tpu.memory_space<vmem>>, vector<1x64xf32>
    %cst_98 = arith.constant dense<0.000000e+00> : vector<64xf32>
    %254 = vector.multi_reduction <add>, %251, %cst_98 [0] : vector<8x64xf32> to vector<64xf32>
    %255 = vector.shape_cast %254 : vector<64xf32> to vector<1x64xf32>
    %cst_99 = arith.constant 8.000000e+00 : f32
    %256 = vector.broadcast %cst_99 : f32 to vector<1x64xf32>
    %257 = arith.divf %255, %256 : vector<1x64xf32>
    %258 = vector.broadcast %257 : vector<1x64xf32> to vector<8x64xf32>
    %259 = arith.subf %251, %258 : vector<8x64xf32>
    %260 = arith.mulf %259, %259 : vector<8x64xf32>
    %cst_100 = arith.constant dense<0.000000e+00> : vector<64xf32>
    %261 = vector.multi_reduction <add>, %260, %cst_100 [0] : vector<8x64xf32> to vector<64xf32>
    %262 = vector.shape_cast %261 : vector<64xf32> to vector<1x64xf32>
    %cst_101 = arith.constant 8.000000e+00 : f32
    %263 = vector.broadcast %cst_101 : f32 to vector<1x64xf32>
    %264 = arith.divf %262, %263 : vector<1x64xf32>
    %cst_102 = arith.constant 9.99999974E-6 : f32
    %265 = vector.broadcast %cst_102 : f32 to vector<1x64xf32>
    %266 = arith.addf %264, %265 : vector<1x64xf32>
    %267 = math.rsqrt %266 : vector<1x64xf32>
    %268 = vector.broadcast %267 : vector<1x64xf32> to vector<8x64xf32>
    %269 = arith.mulf %259, %268 : vector<8x64xf32>
    %270 = vector.broadcast %252 : vector<1x64xf32> to vector<8x64xf32>
    %271 = arith.mulf %269, %270 : vector<8x64xf32>
    %272 = vector.broadcast %253 : vector<1x64xf32> to vector<8x64xf32>
    %273 = arith.addf %271, %272 : vector<8x64xf32>
    %cst_103 = arith.constant 0.000000e+00 : f32
    %274 = vector.broadcast %cst_103 : f32 to vector<8x64xf32>
    %275 = arith.cmpf oge, %273, %274 : vector<8x64xf32>
    %cst_104 = arith.constant 0.00999999977 : f32
    %276 = vector.broadcast %cst_104 : f32 to vector<8x64xf32>
    %277 = arith.mulf %276, %273 : vector<8x64xf32>
    %278 = arith.select %275, %273, %277 : vector<8x64xi1>, vector<8x64xf32>
    %279 = arith.truncf %278 : vector<8x64xf32> to vector<8x64xbf16>
    %c512 = arith.constant 512 : index
    %c384_105 = arith.constant 384 : index
    %280 = vector.load %arg1[%c512, %c384_105] : memref<784x512xbf16, #tpu.memory_space<vmem>>, vector<64x32xbf16>
    %cst_106 = arith.constant dense<0.000000e+00> : vector<8x32xf32>
    %281 = tpu.matmul %279, %280, %cst_106 {dimension_numbers = #tpu.dot_dimension_numbers<[1], [0], [0], [1], [0, 0, 1, 1], [], []>} : vector<8x64xbf16>, vector<64x32xbf16>, vector<8x32xf32> -> vector<8x32xf32>
    %c18 = arith.constant 18 : index
    %c0_107 = arith.constant 0 : index
    %282 = vector.load %arg2[%c18, %c0_107] : memref<21x512xf32, #tpu.memory_space<vmem>>, vector<1x32xf32>
    %c19 = arith.constant 19 : index
    %c0_108 = arith.constant 0 : index
    %283 = vector.load %arg2[%c19, %c0_108] : memref<21x512xf32, #tpu.memory_space<vmem>>, vector<1x32xf32>
    %cst_109 = arith.constant dense<0.000000e+00> : vector<32xf32>
    %284 = vector.multi_reduction <add>, %281, %cst_109 [0] : vector<8x32xf32> to vector<32xf32>
    %285 = vector.shape_cast %284 : vector<32xf32> to vector<1x32xf32>
    %cst_110 = arith.constant 8.000000e+00 : f32
    %286 = vector.broadcast %cst_110 : f32 to vector<1x32xf32>
    %287 = arith.divf %285, %286 : vector<1x32xf32>
    %288 = vector.broadcast %287 : vector<1x32xf32> to vector<8x32xf32>
    %289 = arith.subf %281, %288 : vector<8x32xf32>
    %290 = arith.mulf %289, %289 : vector<8x32xf32>
    %cst_111 = arith.constant dense<0.000000e+00> : vector<32xf32>
    %291 = vector.multi_reduction <add>, %290, %cst_111 [0] : vector<8x32xf32> to vector<32xf32>
    %292 = vector.shape_cast %291 : vector<32xf32> to vector<1x32xf32>
    %cst_112 = arith.constant 8.000000e+00 : f32
    %293 = vector.broadcast %cst_112 : f32 to vector<1x32xf32>
    %294 = arith.divf %292, %293 : vector<1x32xf32>
    %cst_113 = arith.constant 9.99999974E-6 : f32
    %295 = vector.broadcast %cst_113 : f32 to vector<1x32xf32>
    %296 = arith.addf %294, %295 : vector<1x32xf32>
    %297 = math.rsqrt %296 : vector<1x32xf32>
    %298 = vector.broadcast %297 : vector<1x32xf32> to vector<8x32xf32>
    %299 = arith.mulf %289, %298 : vector<8x32xf32>
    %300 = vector.broadcast %282 : vector<1x32xf32> to vector<8x32xf32>
    %301 = arith.mulf %299, %300 : vector<8x32xf32>
    %302 = vector.broadcast %283 : vector<1x32xf32> to vector<8x32xf32>
    %303 = arith.addf %301, %302 : vector<8x32xf32>
    %cst_114 = arith.constant 0.000000e+00 : f32
    %304 = vector.broadcast %cst_114 : f32 to vector<8x32xf32>
    %305 = arith.cmpf oge, %303, %304 : vector<8x32xf32>
    %cst_115 = arith.constant 0.00999999977 : f32
    %306 = vector.broadcast %cst_115 : f32 to vector<8x32xf32>
    %307 = arith.mulf %306, %303 : vector<8x32xf32>
    %308 = arith.select %305, %303, %307 : vector<8x32xi1>, vector<8x32xf32>
    %309 = arith.truncf %308 : vector<8x32xf32> to vector<8x32xbf16>
    %c624 = arith.constant 624 : index
    %c384_116 = arith.constant 384 : index
    %310 = vector.load %arg1[%c624, %c384_116] : memref<784x512xbf16, #tpu.memory_space<vmem>>, vector<32x8xbf16>
    %cst_117 = arith.constant dense<0.000000e+00> : vector<8x8xf32>
    %311 = tpu.matmul %309, %310, %cst_117 {dimension_numbers = #tpu.dot_dimension_numbers<[1], [0], [0], [1], [0, 0, 1, 1], [], []>} : vector<8x32xbf16>, vector<32x8xbf16>, vector<8x8xf32> -> vector<8x8xf32>
    %c20 = arith.constant 20 : index
    %c0_118 = arith.constant 0 : index
    %312 = vector.load %arg2[%c20, %c0_118] : memref<21x512xf32, #tpu.memory_space<vmem>>, vector<1x8xf32>
    %313 = vector.broadcast %312 : vector<1x8xf32> to vector<8x8xf32>
    %314 = arith.addf %311, %313 : vector<8x8xf32>
    %cst_119 = arith.constant 0.000000e+00 : f32
    %315 = vector.broadcast %cst_119 : f32 to vector<8x116xf32>
    %316 = tpu.concatenate %314, %159, %315 in 1 : vector<8x8xf32>, vector<8x4xf32>, vector<8x116xf32> -> vector<8x128xf32>
    %c0_120 = arith.constant 0 : index
    %c0_121 = arith.constant 0 : index
    %317 = vector.load %arg3[%c0_120, %c0_121] : memref<8x128xf32, #tpu.memory_space<vmem>>, vector<8x128xf32>
    tpu.vector_store %arg3[%c0_120, %c0_121], %316 {strides = array<i32>} : memref<8x128xf32, #tpu.memory_space<vmem>>, vector<8x128xf32>,
    return
  }
}

</mosaic_0001>

<llo_original>
// kernel: tpu_custom_call.1
$region0: #{tpu_custom_call.1}
  #allocation0 [shape = 'u32[]', space=smem, size = 0x4, offset = 0x4, fixed_abs, tag = 'smem constant byte address 0x4 - core index']
  #allocation1 [shape = 'u32[144,128]{1,0:T(1,128)}', space=vmem, size = 0x12000, scoped, tag = 'internal scratch']
  %s0 = inlined_call_operand.hbm [shape: f32[8,20], index: 0, kind: input, shape index: {}]
  %s1 = inlined_call_operand.hbm [shape: bf16[784,512], index: 1, kind: input, shape index: {}]
  %s2 = inlined_call_operand.hbm [shape: f32[21,512], index: 2, kind: input, shape index: {}]
  %s3 = inlined_call_operand.hbm [shape: f32[8,128], index: 3, kind: output, shape index: {}]
  %s4 = sld [smem:[#allocation0]]
  $region34: #{tpu_custom_call.1} parent=0
    _
  %s6 = ssub.s32 1, %s4
  %s7 = scalar_select 0, %s6, %s4
  $region1: #{tpu_custom_call.1} parent=0
    #allocation2 [shape = 'u8[4096]{0}', space=vmem, size = 0x1000, scoped, tag = 'input window, operand 0, single buffered']
    #allocation3 [shape = 's32[1]{0}', space=sflag, size = 0x4, scoped, tag = 'scoped memory for tpu_custom_call.1']
    #allocation4 [shape = 's32[1]{0}', space=sflag, size = 0x4, scoped, tag = 'scoped memory for tpu_custom_call.1']
    #allocation5 [shape = 'u8[802816]{0}', space=vmem, size = 0xc4000, scoped, tag = 'input window, operand 1, single buffered']
    #allocation6 [shape = 's32[1]{0}', space=sflag, size = 0x4, scoped, tag = 'scoped memory for tpu_custom_call.1']
    #allocation7 [shape = 'u8[49152]{0}', space=vmem, size = 0xc000, scoped, tag = 'input window, operand 2, single buffered']
    #allocation8 [shape = 'u8[4096]{0}', space=vmem, size = 0x1000, scoped, tag = 'output window, operand 0, single buffered']
    %8 = vsyncpa [#allocation3], 0
    %9 = vsyncpa [#allocation6], 0
    %10 = vsyncpa [#allocation4], 0
    // Predicated region
    $region2: #{tpu_custom_call.1} parent=1 // pred_check
      _
    $region3: #{tpu_custom_call.1} parent=1 // pred_check_branch
      %12 = sbr.rel (0) target = $region5
    $region4: #{tpu_custom_call.1} parent=1 // pred_region
      %s14 = ssub.s32 128, 128
      %15 = vsyncadd [#allocation3], %s14
      %s17 = sshll.u32 [#allocation2], 4
      %s18 = int_to_ptr.vmem [resolvable:$true] %s17
      %20 = dma.hbm_to_vmem [thread:$0]  %s0, 128, %s18, [#allocation3]
    $region5: #{tpu_custom_call.1} parent=1 // pred_fallthru
      _
    // Predicated region
    $region6: #{tpu_custom_call.1} parent=1 // pred_check
      _
    $region7: #{tpu_custom_call.1} parent=1 // pred_check_branch
      %22 = sbr.rel (0) target = $region9
    $region8: #{tpu_custom_call.1} parent=1 // pred_region
      %s24 = ssub.s32 25088, 25088
      %25 = vsyncadd [#allocation6], %s24
      %s26 = sshll.u32 [#allocation5], 4
      %s27 = int_to_ptr.vmem [resolvable:$true] %s26
      %32 = dma.hbm_to_vmem [thread:$0]  %s1, 25088, %s27, [#allocation6], 256, 256, 16
    $region9: #{tpu_custom_call.1} parent=1 // pred_fallthru
      _
    // Predicated region
    $region10: #{tpu_custom_call.1} parent=1 // pred_check
      _
    $region11: #{tpu_custom_call.1} parent=1 // pred_check_branch
      %34 = sbr.rel (0) target = $region13
    $region12: #{tpu_custom_call.1} parent=1 // pred_region
      %s36 = ssub.s32 1536, 1536
      %37 = vsyncadd [#allocation6], %s36
      %s38 = sshll.u32 [#allocation7], 4
      %s39 = int_to_ptr.vmem [resolvable:$true] %s38
      %44 = dma.hbm_to_vmem [thread:$0]  %s2, 1536, %s39, [#allocation6], 512, 512, 32
    $region13: #{tpu_custom_call.1} parent=1 // pred_fallthru
      _
    // Predicated region
    $region14: #{tpu_custom_call.1} parent=1 // pred_check
      _
    $region15: #{tpu_custom_call.1} parent=1 // pred_check_branch
      %46 = sbr.rel (0) target = $region17
    $region16: #{tpu_custom_call.1} parent=1 // pred_region
      %47 = dma.done [#allocation3], 128
    $region17: #{tpu_custom_call.1} parent=1 // pred_fallthru
      _
    // Predicated region
    $region18: #{tpu_custom_call.1} parent=1 // pred_check
      _
    $region19: #{tpu_custom_call.1} parent=1 // pred_check_branch
      %49 = sbr.rel (0) target = $region21
    $region20: #{tpu_custom_call.1} parent=1 // pred_region
      %50 = dma.done [#allocation6], 25088
    $region21: #{tpu_custom_call.1} parent=1 // pred_fallthru
      _
    // Predicated region
    $region22: #{tpu_custom_call.1} parent=1 // pred_check
      _
    $region23: #{tpu_custom_call.1} parent=1 // pred_check_branch
      %52 = sbr.rel (0) target = $region25
    $region24: #{tpu_custom_call.1} parent=1 // pred_region
      %53 = dma.done [#allocation6], 1536
    $region25: #{tpu_custom_call.1} parent=1 // pred_fallthru
      _
    %v55 = vld [vmem:[#allocation2] sm:$0xff]
    %v56 = vpack.c.bf16 %v55, %v55
    %v57 = vld [vmem:[#allocation5 + $0x4cc] sm:$0xf]
    %v58 = vld [vmem:[#allocation5 + $0x4dc] sm:$0xf]
    %v61 = vunpack.c.l.b16 %v57
    %v62 = vunpack.c.l.b16 %v58
    %v63 = vpack.c.b16 %v62, %v61
    %vm65 = vcmask 130048
    %v67 = vsel %vm65, %v56, 0
    %69 = vmatprep.subr.bf16.mxu0 0
    %70 = vmatpush1.bf16.msra.mxu0 %v63
    %71 = vmatprep.subr.bf16.mxu0 0
    %72 = vmatpush1.bf16.msra.mxu0 0
    %73 = vmatprep.subr.bf16.mxu0 0
    %74 = vmatpush1.bf16.msra.mxu0 0
    %75 = vmatprep.subr.bf16.mxu0 0
    %76 = vmatpush1.bf16.msra.mxu0 0
    %77 = vmatprep.subr.bf16.mxu0 0
    %78 = vmatpush1.bf16.msra.mxu0 0
    %79 = vmatprep.subr.bf16.mxu0 0
    %80 = vmatpush1.bf16.msra.mxu0 0
    %81 = vmatprep.subr.bf16.mxu0 0
    %82 = vmatpush1.bf16.msra.mxu0 0
    %83 = vmatprep.subr.bf16.mxu0 0
    %84 = vmatpush1.bf16.msra.mxu0 0
    %85 = vmatprep.subr.bf16.mxu0 0
    %86 = vmatpush1.bf16.msra.mxu0 0
    %87 = vmatprep.subr.bf16.mxu0 0
    %88 = vmatpush1.bf16.msra.mxu0 0
    %89 = vmatprep.subr.bf16.mxu0 0
    %90 = vmatpush1.bf16.msra.mxu0 0
    %91 = vmatprep.subr.bf16.mxu0 0
    %92 = vmatpush1.bf16.msra.mxu0 0
    %93 = vmatprep.subr.bf16.mxu0 0
    %94 = vmatpush1.bf16.msra.mxu0 0
    %95 = vmatprep.subr.bf16.mxu0 0
    %96 = vmatpush1.bf16.msra.mxu0 0
    %97 = vmatprep.subr.bf16.mxu0 0
    %98 = vmatpush1.bf16.msra.mxu0 0
    %99 = vmatprep.subr.bf16.mxu0 0
    %100 = vmatpush1.bf16.msra.mxu0 0
    %101 = vmatprep.mubr.bf16.mxu0 0
    %102 = vmatmul.mubr.bf16.gmra.mrb[0].mxu0 %v67
    %v103 = vpop.f32.mrb[0].mxu0
    %v104 = vadd.f32 0.0, %v103
    %v105 = vpop.f32.mrb[0].mxu0
    %v106 = vpop.f32.mrb[0].mxu0
    %v107 = vpop.f32.mrb[0].mxu0
    %108 = vdwg.mxu0
    %v109 = vld [vmem:[#allocation7] ss:$0 sm:$0xff]
    %v110 = vld [vmem:[#allocation7 + $0x1] ss:$0 sm:$0xff]
    %vm111 = vcmask 261120
    %v112 = vsel %vm111, %v104, 0.0
    %v113 = vrot.slane %v112, 4
    %v114 = vadd.f32 %v112, %v113
    %v115 = vrot.slane %v114, 2
    %v116 = vadd.f32 %v114, %v115
    %v117 = vrot.slane %v116, 1
    %v118 = vadd.f32 %v116, %v117
    %v119 = vrcp.pop 8.0
    %v120 = vmul.f32 %v118, %v119
    %v121 = vsub.f32 %v104, %v120
    %v122 = vmul.f32 %v121, %v121
    %v123 = vsel %vm111, %v122, 0.0
    %v124 = vrot.slane %v123, 4
    %v125 = vadd.f32 %v123, %v124
    %v126 = vrot.slane %v125, 2
    %v127 = vadd.f32 %v125, %v126
    %v128 = vrot.slane %v127, 1
    %v129 = vadd.f32 %v127, %v128
    %v130 = vmul.f32 %v129, %v119
    %v131 = vadd.f32 %v130, 1e-05
    %v132 = vrsqrt.pop %v131
    %v133 = vmul.f32 %v121, %v132
    %v134 = vmul.f32 %v133, %v109
    %v135 = vadd.f32 %v134, %v110
    %vm136 = vcmp.ge.f32.partialorder %v135, 0.0
    %v137 = vmul.f32 %v135, 0.01
    %v138 = vsel %vm136, %v135, %v137
    %v139 = vpack.c.bf16 %v138, %v138
    %v140 = vld [vmem:[#allocation5 + $0x48c] sm:$0xf]
    %v141 = vld [vmem:[#allocation5 + $0x49c] sm:$0xf]
    %v142 = vld [vmem:[#allocation5 + $0x4ac] sm:$0xf]
    %v143 = vld [vmem:[#allocation5 + $0x4bc] sm:$0xf]
    %v148 = vunpack.c.l.b16 %v140
    %v149 = vunpack.c.l.b16 %v141
    %v150 = vunpack.c.l.b16 %v142
    %v151 = vunpack.c.l.b16 %v143
    %v152 = vpack.c.b16 %v149, %v148
    %v153 = vpack.c.b16 %v151, %v150
    %v157 = vsel %vm111, %v139, 0
    %159 = vmatprep.subr.bf16.mxu0 0
    %160 = vmatpush1.bf16.msra.mxu0 %v152
    %161 = vmatprep.subr.bf16.mxu0 0
    %162 = vmatpush1.bf16.msra.mxu0 %v153
    %163 = vmatprep.subr.bf16.mxu0 0
    %164 = vmatpush1.bf16.msra.mxu0 0
    %165 = vmatprep.subr.bf16.mxu0 0
    %166 = vmatpush1.bf16.msra.mxu0 0
    %167 = vmatprep.subr.bf16.mxu0 0
    %168 = vmatpush1.bf16.msra.mxu0 0
    %169 = vmatprep.subr.bf16.mxu0 0
    %170 = vmatpush1.bf16.msra.mxu0 0
    %171 = vmatprep.subr.bf16.mxu0 0
    %172 = vmatpush1.bf16.msra.mxu0 0
    %173 = vmatprep.subr.bf16.mxu0 0
    %174 = vmatpush1.bf16.msra.mxu0 0
    %175 = vmatprep.subr.bf16.mxu0 0
    %176 = vmatpush1.bf16.msra.mxu0 0
    %177 = vmatprep.subr.bf16.mxu0 0
    %178 = vmatpush1.bf16.msra.mxu0 0
    %179 = vmatprep.subr.bf16.mxu0 0
    %180 = vmatpush1.bf16.msra.mxu0 0
    %181 = vmatprep.subr.bf16.mxu0 0
    %182 = vmatpush1.bf16.msra.mxu0 0
    %183 = vmatprep.subr.bf16.mxu0 0
    %184 = vmatpush1.bf16.msra.mxu0 0
    %185 = vmatprep.subr.bf16.mxu0 0
    %186 = vmatpush1.bf16.msra.mxu0 0
    %187 = vmatprep.subr.bf16.mxu0 0
    %188 = vmatpush1.bf16.msra.mxu0 0
    %189 = vmatprep.subr.bf16.mxu0 0
    %190 = vmatpush1.bf16.msra.mxu0 0
    %191 = vmatprep.mubr.bf16.mxu0 0
    %192 = vmatmul.mubr.bf16.gmra.mrb[0].mxu0 %v157
    %v193 = vpop.f32.mrb[0].mxu0
    %v194 = vadd.f32 0.0, %v193
    %v195 = vpop.f32.mrb[0].mxu0
    %v196 = vpop.f32.mrb[0].mxu0
    %v197 = vpop.f32.mrb[0].mxu0
    %198 = vdwg.mxu0
    %v199 = vld [vmem:[#allocation7 + $0x2] ss:$0 sm:$0xff]
    %v200 = vld [vmem:[#allocation7 + $0x3] ss:$0 sm:$0xff]
    %vm201 = vcmask 523264
    %v202 = vsel %vm201, %v194, 0.0
    %v203 = vrot.slane %v202, 4
    %v204 = vadd.f32 %v202, %v203
    %v205 = vrot.slane %v204, 2
    %v206 = vadd.f32 %v204, %v205
    %v207 = vrot.slane %v206, 1
    %v208 = vadd.f32 %v206, %v207
    %v209 = vmul.f32 %v208, %v119
    %v210 = vsub.f32 %v194, %v209
    %v211 = vmul.f32 %v210, %v210
    %v212 = vsel %vm201, %v211, 0.0
    %v213 = vrot.slane %v212, 4
    %v214 = vadd.f32 %v212, %v213
    %v215 = vrot.slane %v214, 2
    %v216 = vadd.f32 %v214, %v215
    %v217 = vrot.slane %v216, 1
    %v218 = vadd.f32 %v216, %v217
    %v219 = vmul.f32 %v218, %v119
    %v220 = vadd.f32 %v219, 1e-05
    %v221 = vrsqrt.pop %v220
    %v222 = vmul.f32 %v210, %v221
    %v223 = vmul.f32 %v222, %v199
    %v224 = vadd.f32 %v223, %v200
    %vm225 = vcmp.ge.f32.partialorder %v224, 0.0
    %v226 = vmul.f32 %v224, 0.01
    %v227 = vsel %vm225, %v224, %v226
    %v228 = vpack.c.bf16 %v227, %v227
    %v229 = vld [vmem:[#allocation5 + $0x508] sm:$0xf]
    %v230 = vld [vmem:[#allocation5 + $0x518] sm:$0xf]
    %v231 = vld [vmem:[#allocation5 + $0x528] sm:$0xf]
    %v232 = vld [vmem:[#allocation5 + $0x538] sm:$0xf]
    %v233 = vld [vmem:[#allocation5 + $0x548] sm:$0xf]
    %v234 = vld [vmem:[#allocation5 + $0x558] sm:$0xf]
    %v235 = vld [vmem:[#allocation5 + $0x568] sm:$0xf]
    %v236 = vld [vmem:[#allocation5 + $0x578] sm:$0xf]
    %v245 = vunpack.c.l.b16 %v229
    %v246 = vunpack.c.l.b16 %v230
    %v247 = vunpack.c.l.b16 %v231
    %v248 = vunpack.c.l.b16 %v232
    %v249 = vunpack.c.l.b16 %v233
    %v250 = vunpack.c.l.b16 %v234
    %v251 = vunpack.c.l.b16 %v235
    %v252 = vunpack.c.l.b16 %v236
    %v253 = vpack.c.b16 %v246, %v245
    %v254 = vpack.c.b16 %v248, %v247
    %v255 = vpack.c.b16 %v250, %v249
    %v256 = vpack.c.b16 %v252, %v251
    %v262 = vsel %vm201, %v228, 0
    %264 = vmatprep.subr.bf16.mxu0 0
    %265 = vmatpush1.bf16.msra.mxu0 %v253
    %266 = vmatprep.subr.bf16.mxu0 0
    %267 = vmatpush1.bf16.msra.mxu0 %v254
    %268 = vmatprep.subr.bf16.mxu0 0
    %269 = vmatpush1.bf16.msra.mxu0 %v255
    %270 = vmatprep.subr.bf16.mxu0 0
    %271 = vmatpush1.bf16.msra.mxu0 %v256
    %272 = vmatprep.subr.bf16.mxu0 0
    %273 = vmatpush1.bf16.msra.mxu0 0
    %274 = vmatprep.subr.bf16.mxu0 0
    %275 = vmatpush1.bf16.msra.mxu0 0
    %276 = vmatprep.subr.bf16.mxu0 0
    %277 = vmatpush1.bf16.msra.mxu0 0
    %278 = vmatprep.subr.bf16.mxu0 0
    %279 = vmatpush1.bf16.msra.mxu0 0
    %280 = vmatprep.subr.bf16.mxu0 0
    %281 = vmatpush1.bf16.msra.mxu0 0
    %282 = vmatprep.subr.bf16.mxu0 0
    %283 = vmatpush1.bf16.msra.mxu0 0
    %284 = vmatprep.subr.bf16.mxu0 0
    %285 = vmatpush1.bf16.msra.mxu0 0
    %286 = vmatprep.subr.bf16.mxu0 0
    %287 = vmatpush1.bf16.msra.mxu0 0
    %288 = vmatprep.subr.bf16.mxu0 0
    %289 = vmatpush1.bf16.msra.mxu0 0
    %290 = vmatprep.subr.bf16.mxu0 0
    %291 = vmatpush1.bf16.msra.mxu0 0
    %292 = vmatprep.subr.bf16.mxu0 0
    %293 = vmatpush1.bf16.msra.mxu0 0
    %294 = vmatprep.subr.bf16.mxu0 0
    %295 = vmatpush1.bf16.msra.mxu0 0
    %296 = vmatprep.mubr.bf16.mxu0 0
    %297 = vmatmul.mubr.bf16.gmra.mrb[0].mxu0 %v262
    %v298 = vpop.f32.mrb[0].mxu0
    %v299 = vadd.f32 0.0, %v298
    %v300 = vpop.f32.mrb[0].mxu0
    %v301 = vpop.f32.mrb[0].mxu0
    %v302 = vpop.f32.mrb[0].mxu0
    %303 = vdwg.mxu0
    %v304 = vld [vmem:[#allocation7 + $0x4] ss:$0 sm:$0xff]
    %v305 = vld [vmem:[#allocation7 + $0x5] ss:$0 sm:$0xff]
    %v306 = vrot.slane %v299, 4
    %v307 = vadd.f32 %v299, %v306
    %v308 = vrot.slane %v307, 2
    %v309 = vadd.f32 %v307, %v308
    %v310 = vrot.slane %v309, 1
    %v311 = vadd.f32 %v309, %v310
    %v312 = vmul.f32 %v311, %v119
    %v313 = vsub.f32 %v299, %v312
    %v314 = vmul.f32 %v313, %v313
    %v315 = vrot.slane %v314, 4
    %v316 = vadd.f32 %v314, %v315
    %v317 = vrot.slane %v316, 2
    %v318 = vadd.f32 %v316, %v317
    %v319 = vrot.slane %v318, 1
    %v320 = vadd.f32 %v318, %v319
    %v321 = vmul.f32 %v320, %v119
    %v322 = vadd.f32 %v321, 1e-05
    %v323 = vrsqrt.pop %v322
    %v324 = vmul.f32 %v313, %v323
    %v325 = vmul.f32 %v324, %v304
    %v326 = vadd.f32 %v325, %v305
    %vm327 = vcmp.ge.f32.partialorder %v326, 0.0
    %v328 = vmul.f32 %v326, 0.01
    %v329 = vsel %vm327, %v326, %v328
    %v330 = vpack.c.bf16 %v329, %v329
    %v331 = vld [vmem:[#allocation5 + $0x208] sm:$0xff]
    %v332 = vld [vmem:[#allocation5 + $0x218] sm:$0xff]
    %v333 = vld [vmem:[#allocation5 + $0x228] sm:$0xff]
    %v334 = vld [vmem:[#allocation5 + $0x238] sm:$0xff]
    %v335 = vld [vmem:[#allocation5 + $0x248] sm:$0xff]
    %v336 = vld [vmem:[#allocation5 + $0x258] sm:$0xff]
    %v337 = vld [vmem:[#allocation5 + $0x268] sm:$0xff]
    %v338 = vld [vmem:[#allocation5 + $0x278] sm:$0xff]
    %v339 = vld [vmem:[#allocation5 + $0x288] sm:$0xff]
    %v340 = vld [vmem:[#allocation5 + $0x298] sm:$0xff]
    %v341 = vld [vmem:[#allocation5 + $0x2a8] sm:$0xff]
    %v342 = vld [vmem:[#allocation5 + $0x2b8] sm:$0xff]
    %v343 = vld [vmem:[#allocation5 + $0x2c8] sm:$0xff]
    %v344 = vld [vmem:[#allocation5 + $0x2d8] sm:$0xff]
    %v345 = vld [vmem:[#allocation5 + $0x2e8] sm:$0xff]
    %v346 = vld [vmem:[#allocation5 + $0x2f8] sm:$0xff]
    %v363 = vunpack.c.l.b16 %v331
    %v364 = vunpack.c.h.b16 %v331
    %v365 = vunpack.c.l.b16 %v332
    %v366 = vunpack.c.h.b16 %v332
    %v367 = vunpack.c.l.b16 %v333
    %v368 = vunpack.c.h.b16 %v333
    %v369 = vunpack.c.l.b16 %v334
    %v370 = vunpack.c.h.b16 %v334
    %v371 = vunpack.c.l.b16 %v335
    %v372 = vunpack.c.h.b16 %v335
    %v373 = vunpack.c.l.b16 %v336
    %v374 = vunpack.c.h.b16 %v336
    %v375 = vunpack.c.l.b16 %v337
    %v376 = vunpack.c.h.b16 %v337
    %v377 = vunpack.c.l.b16 %v338
    %v378 = vunpack.c.h.b16 %v338
    %v379 = vunpack.c.l.b16 %v339
    %v380 = vunpack.c.h.b16 %v339
    %v381 = vunpack.c.l.b16 %v340
    %v382 = vunpack.c.h.b16 %v340
    %v383 = vunpack.c.l.b16 %v341
    %v384 = vunpack.c.h.b16 %v341
    %v385 = vunpack.c.l.b16 %v342
    %v386 = vunpack.c.h.b16 %v342
    %v387 = vunpack.c.l.b16 %v343
    %v388 = vunpack.c.h.b16 %v343
    %v389 = vunpack.c.l.b16 %v344
    %v390 = vunpack.c.h.b16 %v344
    %v391 = vunpack.c.l.b16 %v345
    %v392 = vunpack.c.h.b16 %v345
    %v393 = vunpack.c.l.b16 %v346
    %v394 = vunpack.c.h.b16 %v346
    %v395 = vpack.c.b16 %v365, %v363
    %v396 = vpack.c.b16 %v366, %v364
    %v397 = vpack.c.b16 %v369, %v367
    %v398 = vpack.c.b16 %v370, %v368
    %v399 = vpack.c.b16 %v373, %v371
    %v400 = vpack.c.b16 %v374, %v372
    %v401 = vpack.c.b16 %v377, %v375
    %v402 = vpack.c.b16 %v378, %v376
    %v403 = vpack.c.b16 %v381, %v379
    %v404 = vpack.c.b16 %v382, %v380
    %v405 = vpack.c.b16 %v385, %v383
    %v406 = vpack.c.b16 %v386, %v384
    %v407 = vpack.c.b16 %v389, %v387
    %v408 = vpack.c.b16 %v390, %v388
    %v409 = vpack.c.b16 %v393, %v391
    %v410 = vpack.c.b16 %v394, %v392
    %427 = vmatprep.subr.bf16.mxu0 %v396
    %428 = vmatpush1.bf16.msra.mxu0 %v395
    %429 = vmatprep.subr.bf16.mxu0 %v398
    %430 = vmatpush1.bf16.msra.mxu0 %v397
    %431 = vmatprep.subr.bf16.mxu0 %v400
    %432 = vmatpush1.bf16.msra.mxu0 %v399
    %433 = vmatprep.subr.bf16.mxu0 %v402
    %434 = vmatpush1.bf16.msra.mxu0 %v401
    %435 = vmatprep.subr.bf16.mxu0 %v404
    %436 = vmatpush1.bf16.msra.mxu0 %v403
    %437 = vmatprep.subr.bf16.mxu0 %v406
    %438 = vmatpush1.bf16.msra.mxu0 %v405
    %439 = vmatprep.subr.bf16.mxu0 %v408
    %440 = vmatpush1.bf16.msra.mxu0 %v407
    %441 = vmatprep.subr.bf16.mxu0 %v410
    %442 = vmatpush1.bf16.msra.mxu0 %v409
    %443 = vmatprep.subr.bf16.mxu0 0
    %444 = vmatpush1.bf16.msra.mxu0 0
    %445 = vmatprep.subr.bf16.mxu0 0
    %446 = vmatpush1.bf16.msra.mxu0 0
    %447 = vmatprep.subr.bf16.mxu0 0
    %448 = vmatpush1.bf16.msra.mxu0 0
    %449 = vmatprep.subr.bf16.mxu0 0
    %450 = vmatpush1.bf16.msra.mxu0 0
    %451 = vmatprep.subr.bf16.mxu0 0
    %452 = vmatpush1.bf16.msra.mxu0 0
    %453 = vmatprep.subr.bf16.mxu0 0
    %454 = vmatpush1.bf16.msra.mxu0 0
    %455 = vmatprep.subr.bf16.mxu0 0
    %456 = vmatpush1.bf16.msra.mxu0 0
    %457 = vmatprep.subr.bf16.mxu0 0
    %458 = vmatpush1.bf16.msra.mxu0 0
    %459 = vmatprep.mubr.bf16.mxu0 0
    %460 = vmatmul.mubr.bf16.gmra.mrb[0].mxu0 %v330
    %v461 = vpop.f32.mrb[0].mxu0
    %v462 = vadd.f32 0.0, %v461
    %v463 = vpop.f32.mrb[0].mxu0
    %v464 = vadd.f32 0.0, %v463
    %v465 = vpop.f32.mrb[0].mxu0
    %v466 = vpop.f32.mrb[0].mxu0
    %467 = vdwg.mxu0
    %s468 = scalar_lea.vmem [#allocation7], 6
    %v469 = vld [vmem:[%s468] ss:$8 sm:$0x3]
    %s470 = scalar_lea.vmem [#allocation7], 7
    %v471 = vld [vmem:[%s470] ss:$8 sm:$0x3]
    %v472 = vrot.slane %v462, 4
    %v473 = vadd.f32 %v462, %v472
    %v474 = vrot.slane %v473, 2
    %v475 = vadd.f32 %v473, %v474
    %v476 = vrot.slane %v475, 1
    %v477 = vadd.f32 %v475, %v476
    %v478 = vrot.slane %v464, 4
    %v479 = vadd.f32 %v464, %v478
    %v480 = vrot.slane %v479, 2
    %v481 = vadd.f32 %v479, %v480
    %v482 = vrot.slane %v481, 1
    %v483 = vadd.f32 %v481, %v482
    %v484 = vmul.f32 %v477, %v119
    %v485 = vmul.f32 %v483, %v119
    %v486 = vsub.f32 %v462, %v484
    %v487 = vsub.f32 %v464, %v485
    %v488 = vmul.f32 %v486, %v486
    %v489 = vmul.f32 %v487, %v487
    %v490 = vrot.slane %v488, 4
    %v491 = vadd.f32 %v488, %v490
    %v492 = vrot.slane %v491, 2
    %v493 = vadd.f32 %v491, %v492
    %v494 = vrot.slane %v493, 1
    %v495 = vadd.f32 %v493, %v494
    %v496 = vrot.slane %v489, 4
    %v497 = vadd.f32 %v489, %v496
    %v498 = vrot.slane %v497, 2
    %v499 = vadd.f32 %v497, %v498
    %v500 = vrot.slane %v499, 1
    %v501 = vadd.f32 %v499, %v500
    %v502 = vmul.f32 %v495, %v119
    %v503 = vmul.f32 %v501, %v119
    %v504 = vadd.f32 %v502, 1e-05
    %v505 = vadd.f32 %v503, 1e-05
    %v506 = vrsqrt.pop %v504
    %v507 = vrsqrt.pop %v505
    %v508 = vmul.f32 %v486, %v506
    %v509 = vmul.f32 %v487, %v507
    %v511 = vlaneseq
    %v512 = vshrl.u32 %v511, 7
    %v513 = vsub.s32 0, %v512
    %v514 = vrot.slane %v469, %v513
    %v515 = vlaneseq
    %v516 = vshrl.u32 %v515, 7
    %v517 = vsub.s32 1, %v516
    %v518 = vrot.slane %v469, %v517
    %v521 = vmul.f32 %v508, %v514
    %v522 = vmul.f32 %v509, %v518
    %v524 = vlaneseq
    %v525 = vshrl.u32 %v524, 7
    %v526 = vsub.s32 0, %v525
    %v527 = vrot.slane %v471, %v526
    %v528 = vlaneseq
    %v529 = vshrl.u32 %v528, 7
    %v530 = vsub.s32 1, %v529
    %v531 = vrot.slane %v471, %v530
    %v534 = vadd.f32 %v521, %v527
    %v535 = vadd.f32 %v522, %v531
    %vm536 = vcmp.ge.f32.partialorder %v534, 0.0
    %vm537 = vcmp.ge.f32.partialorder %v535, 0.0
    %v538 = vmul.f32 %v534, 0.01
    %v539 = vmul.f32 %v535, 0.01
    %v540 = vsel %vm536, %v534, %v538
    %v541 = vsel %vm537, %v535, %v539
    %v542 = vpack.c.bf16 %v540, %v540
    %v543 = vpack.c.bf16 %v541, %v541
    %v544 = vld [vmem:[#allocation5] sm:$0xff]
    %v545 = vld [vmem:[#allocation5 + $0x8] sm:$0xff]
    %v546 = vld [vmem:[#allocation5 + $0x10] sm:$0xff]
    %v547 = vld [vmem:[#allocation5 + $0x18] sm:$0xff]
    %v548 = vld [vmem:[#allocation5 + $0x20] sm:$0xff]
    %v549 = vld [vmem:[#allocation5 + $0x28] sm:$0xff]
    %v550 = vld [vmem:[#allocation5 + $0x30] sm:$0xff]
    %v551 = vld [vmem:[#allocation5 + $0x38] sm:$0xff]
    %v552 = vld [vmem:[#allocation5 + $0x40] sm:$0xff]
    %v553 = vld [vmem:[#allocation5 + $0x48] sm:$0xff]
    %v554 = vld [vmem:[#allocation5 + $0x50] sm:$0xff]
    %v555 = vld [vmem:[#allocation5 + $0x58] sm:$0xff]
    %v556 = vld [vmem:[#allocation5 + $0x60] sm:$0xff]
    %v557 = vld [vmem:[#allocation5 + $0x68] sm:$0xff]
    %v558 = vld [vmem:[#allocation5 + $0x70] sm:$0xff]
    %v559 = vld [vmem:[#allocation5 + $0x78] sm:$0xff]
    %v560 = vld [vmem:[#allocation5 + $0x80] sm:$0xff]
    %v561 = vld [vmem:[#allocation5 + $0x88] sm:$0xff]
    %v562 = vld [vmem:[#allocation5 + $0x90] sm:$0xff]
    %v563 = vld [vmem:[#allocation5 + $0x98] sm:$0xff]
    %v564 = vld [vmem:[#allocation5 + $0xa0] sm:$0xff]
    %v565 = vld [vmem:[#allocation5 + $0xa8] sm:$0xff]
    %v566 = vld [vmem:[#allocation5 + $0xb0] sm:$0xff]
    %v567 = vld [vmem:[#allocation5 + $0xb8] sm:$0xff]
    %v568 = vld [vmem:[#allocation5 + $0xc0] sm:$0xff]
    %v569 = vld [vmem:[#allocation5 + $0xc8] sm:$0xff]
    %v570 = vld [vmem:[#allocation5 + $0xd0] sm:$0xff]
    %v571 = vld [vmem:[#allocation5 + $0xd8] sm:$0xff]
    %v572 = vld [vmem:[#allocation5 + $0xe0] sm:$0xff]
    %v573 = vld [vmem:[#allocation5 + $0xe8] sm:$0xff]
    %v574 = vld [vmem:[#allocation5 + $0xf0] sm:$0xff]
    %v575 = vld [vmem:[#allocation5 + $0xf8] sm:$0xff]
    %v576 = vld [vmem:[#allocation5 + $0x100] sm:$0xff]
    %v577 = vld [vmem:[#allocation5 + $0x108] sm:$0xff]
    %v578 = vld [vmem:[#allocation5 + $0x110] sm:$0xff]
    %v579 = vld [vmem:[#allocation5 + $0x118] sm:$0xff]
    %v580 = vld [vmem:[#allocation5 + $0x120] sm:$0xff]
    %v581 = vld [vmem:[#allocation5 + $0x128] sm:$0xff]
    %v582 = vld [vmem:[#allocation5 + $0x130] sm:$0xff]
    %v583 = vld [vmem:[#allocation5 + $0x138] sm:$0xff]
    %v584 = vld [vmem:[#allocation5 + $0x140] sm:$0xff]
    %v585 = vld [vmem:[#allocation5 + $0x148] sm:$0xff]
    %v586 = vld [vmem:[#allocation5 + $0x150] sm:$0xff]
    %v587 = vld [vmem:[#allocation5 + $0x158] sm:$0xff]
    %v588 = vld [vmem:[#allocation5 + $0x160] sm:$0xff]
    %v589 = vld [vmem:[#allocation5 + $0x168] sm:$0xff]
    %v590 = vld [vmem:[#allocation5 + $0x170] sm:$0xff]
    %v591 = vld [vmem:[#allocation5 + $0x178] sm:$0xff]
    %v592 = vld [vmem:[#allocation5 + $0x180] sm:$0xff]
    %v593 = vld [vmem:[#allocation5 + $0x188] sm:$0xff]
    %v594 = vld [vmem:[#allocation5 + $0x190] sm:$0xff]
    %v595 = vld [vmem:[#allocation5 + $0x198] sm:$0xff]
    %v596 = vld [vmem:[#allocation5 + $0x1a0] sm:$0xff]
    %v597 = vld [vmem:[#allocation5 + $0x1a8] sm:$0xff]
    %v598 = vld [vmem:[#allocation5 + $0x1b0] sm:$0xff]
    %v599 = vld [vmem:[#allocation5 + $0x1b8] sm:$0xff]
    %v600 = vld [vmem:[#allocation5 + $0x1c0] sm:$0xff]
    %v601 = vld [vmem:[#allocation5 + $0x1c8] sm:$0xff]
    %v602 = vld [vmem:[#allocation5 + $0x1d0] sm:$0xff]
    %v603 = vld [vmem:[#allocation5 + $0x1d8] sm:$0xff]
    %v604 = vld [vmem:[#allocation5 + $0x1e0] sm:$0xff]
    %v605 = vld [vmem:[#allocation5 + $0x1e8] sm:$0xff]
    %v606 = vld [vmem:[#allocation5 + $0x1f0] sm:$0xff]
    %v607 = vld [vmem:[#allocation5 + $0x1f8] sm:$0xff]
    %v672 = vunpack.c.l.b16 %v544
    %v673 = vunpack.c.h.b16 %v544
    %v674 = vunpack.c.l.b16 %v545
    %v675 = vunpack.c.h.b16 %v545
    %v676 = vunpack.c.l.b16 %v546
    %v677 = vunpack.c.h.b16 %v546
    %v678 = vunpack.c.l.b16 %v547
    %v679 = vunpack.c.h.b16 %v547
    %v680 = vunpack.c.l.b16 %v548
    %v681 = vunpack.c.h.b16 %v548
    %v682 = vunpack.c.l.b16 %v549
    %v683 = vunpack.c.h.b16 %v549
    %v684 = vunpack.c.l.b16 %v550
    %v685 = vunpack.c.h.b16 %v550
    %v686 = vunpack.c.l.b16 %v551
    %v687 = vunpack.c.h.b16 %v551
    %v688 = vunpack.c.l.b16 %v552
    %v689 = vunpack.c.h.b16 %v552
    %v690 = vunpack.c.l.b16 %v553
    %v691 = vunpack.c.h.b16 %v553
    %v692 = vunpack.c.l.b16 %v554
    %v693 = vunpack.c.h.b16 %v554
    %v694 = vunpack.c.l.b16 %v555
    %v695 = vunpack.c.h.b16 %v555
    %v696 = vunpack.c.l.b16 %v556
    %v697 = vunpack.c.h.b16 %v556
    %v698 = vunpack.c.l.b16 %v557
    %v699 = vunpack.c.h.b16 %v557
    %v700 = vunpack.c.l.b16 %v558
    %v701 = vunpack.c.h.b16 %v558
    %v702 = vunpack.c.l.b16 %v559
    %v703 = vunpack.c.h.b16 %v559
    %v704 = vunpack.c.l.b16 %v560
    %v705 = vunpack.c.h.b16 %v560
    %v706 = vunpack.c.l.b16 %v561
    %v707 = vunpack.c.h.b16 %v561
    %v708 = vunpack.c.l.b16 %v562
    %v709 = vunpack.c.h.b16 %v562
    %v710 = vunpack.c.l.b16 %v563
    %v711 = vunpack.c.h.b16 %v563
    %v712 = vunpack.c.l.b16 %v564
    %v713 = vunpack.c.h.b16 %v564
    %v714 = vunpack.c.l.b16 %v565
    %v715 = vunpack.c.h.b16 %v565
    %v716 = vunpack.c.l.b16 %v566
    %v717 = vunpack.c.h.b16 %v566
    %v718 = vunpack.c.l.b16 %v567
    %v719 = vunpack.c.h.b16 %v567
    %v720 = vunpack.c.l.b16 %v568
    %v721 = vunpack.c.h.b16 %v568
    %v722 = vunpack.c.l.b16 %v569
    %v723 = vunpack.c.h.b16 %v569
    %v724 = vunpack.c.l.b16 %v570
    %v725 = vunpack.c.h.b16 %v570
    %v726 = vunpack.c.l.b16 %v571
    %v727 = vunpack.c.h.b16 %v571
    %v728 = vunpack.c.l.b16 %v572
    %v729 = vunpack.c.h.b16 %v572
    %v730 = vunpack.c.l.b16 %v573
    %v731 = vunpack.c.h.b16 %v573
    %v732 = vunpack.c.l.b16 %v574
    %v733 = vunpack.c.h.b16 %v574
    %v734 = vunpack.c.l.b16 %v575
    %v735 = vunpack.c.h.b16 %v575
    %v736 = vunpack.c.l.b16 %v576
    %v737 = vunpack.c.h.b16 %v576
    %v738 = vunpack.c.l.b16 %v577
    %v739 = vunpack.c.h.b16 %v577
    %v740 = vunpack.c.l.b16 %v578
    %v741 = vunpack.c.h.b16 %v578
    %v742 = vunpack.c.l.b16 %v579
    %v743 = vunpack.c.h.b16 %v579
    %v744 = vunpack.c.l.b16 %v580
    %v745 = vunpack.c.h.b16 %v580
    %v746 = vunpack.c.l.b16 %v581
    %v747 = vunpack.c.h.b16 %v581
    %v748 = vunpack.c.l.b16 %v582
    %v749 = vunpack.c.h.b16 %v582
    %v750 = vunpack.c.l.b16 %v583
    %v751 = vunpack.c.h.b16 %v583
    %v752 = vunpack.c.l.b16 %v584
    %v753 = vunpack.c.h.b16 %v584
    %v754 = vunpack.c.l.b16 %v585
    %v755 = vunpack.c.h.b16 %v585
    %v756 = vunpack.c.l.b16 %v586
    %v757 = vunpack.c.h.b16 %v586
    %v758 = vunpack.c.l.b16 %v587
    %v759 = vunpack.c.h.b16 %v587
    %v760 = vunpack.c.l.b16 %v588
    %v761 = vunpack.c.h.b16 %v588
    %v762 = vunpack.c.l.b16 %v589
    %v763 = vunpack.c.h.b16 %v589
    %v764 = vunpack.c.l.b16 %v590
    %v765 = vunpack.c.h.b16 %v590
    %v766 = vunpack.c.l.b16 %v591
    %v767 = vunpack.c.h.b16 %v591
    %v768 = vunpack.c.l.b16 %v592
    %v769 = vunpack.c.h.b16 %v592
    %v770 = vunpack.c.l.b16 %v593
    %v771 = vunpack.c.h.b16 %v593
    %v772 = vunpack.c.l.b16 %v594
    %v773 = vunpack.c.h.b16 %v594
    %v774 = vunpack.c.l.b16 %v595
    %v775 = vunpack.c.h.b16 %v595
    %v776 = vunpack.c.l.b16 %v596
    %v777 = vunpack.c.h.b16 %v596
    %v778 = vunpack.c.l.b16 %v597
    %v779 = vunpack.c.h.b16 %v597
    %v780 = vunpack.c.l.b16 %v598
    %v781 = vunpack.c.h.b16 %v598
    %v782 = vunpack.c.l.b16 %v599
    %v783 = vunpack.c.h.b16 %v599
    %v784 = vunpack.c.l.b16 %v600
    %v785 = vunpack.c.h.b16 %v600
    %v786 = vunpack.c.l.b16 %v601
    %v787 = vunpack.c.h.b16 %v601
    %v788 = vunpack.c.l.b16 %v602
    %v789 = vunpack.c.h.b16 %v602
    %v790 = vunpack.c.l.b16 %v603
    %v791 = vunpack.c.h.b16 %v603
    %v792 = vunpack.c.l.b16 %v604
    %v793 = vunpack.c.h.b16 %v604
    %v794 = vunpack.c.l.b16 %v605
    %v795 = vunpack.c.h.b16 %v605
    %v796 = vunpack.c.l.b16 %v606
    %v797 = vunpack.c.h.b16 %v606
    %v798 = vunpack.c.l.b16 %v607
    %v799 = vunpack.c.h.b16 %v607
    %v800 = vpack.c.b16 %v676, %v672
    %v801 = vpack.c.b16 %v677, %v673
    %v802 = vpack.c.b16 %v678, %v674
    %v803 = vpack.c.b16 %v679, %v675
    %v804 = vpack.c.b16 %v684, %v680
    %v805 = vpack.c.b16 %v685, %v681
    %v806 = vpack.c.b16 %v686, %v682
    %v807 = vpack.c.b16 %v687, %v683
    %v808 = vpack.c.b16 %v692, %v688
    %v809 = vpack.c.b16 %v693, %v689
    %v810 = vpack.c.b16 %v694, %v690
    %v811 = vpack.c.b16 %v695, %v691
    %v812 = vpack.c.b16 %v700, %v696
    %v813 = vpack.c.b16 %v701, %v697
    %v814 = vpack.c.b16 %v702, %v698
    %v815 = vpack.c.b16 %v703, %v699
    %v816 = vpack.c.b16 %v708, %v704
    %v817 = vpack.c.b16 %v709, %v705
    %v818 = vpack.c.b16 %v710, %v706
    %v819 = vpack.c.b16 %v711, %v707
    %v820 = vpack.c.b16 %v716, %v712
    %v821 = vpack.c.b16 %v717, %v713
    %v822 = vpack.c.b16 %v718, %v714
    %v823 = vpack.c.b16 %v719, %v715
    %v824 = vpack.c.b16 %v724, %v720
    %v825 = vpack.c.b16 %v725, %v721
    %v826 = vpack.c.b16 %v726, %v722
    %v827 = vpack.c.b16 %v727, %v723
    %v828 = vpack.c.b16 %v732, %v728
    %v829 = vpack.c.b16 %v733, %v729
    %v830 = vpack.c.b16 %v734, %v730
    %v831 = vpack.c.b16 %v735, %v731
    %v832 = vpack.c.b16 %v740, %v736
    %v833 = vpack.c.b16 %v741, %v737
    %v834 = vpack.c.b16 %v742, %v738
    %v835 = vpack.c.b16 %v743, %v739
    %v836 = vpack.c.b16 %v748, %v744
    %v837 = vpack.c.b16 %v749, %v745
    %v838 = vpack.c.b16 %v750, %v746
    %v839 = vpack.c.b16 %v751, %v747
    %v840 = vpack.c.b16 %v756, %v752
    %v841 = vpack.c.b16 %v757, %v753
    %v842 = vpack.c.b16 %v758, %v754
    %v843 = vpack.c.b16 %v759, %v755
    %v844 = vpack.c.b16 %v764, %v760
    %v845 = vpack.c.b16 %v765, %v761
    %v846 = vpack.c.b16 %v766, %v762
    %v847 = vpack.c.b16 %v767, %v763
    %v848 = vpack.c.b16 %v772, %v768
    %v849 = vpack.c.b16 %v773, %v769
    %v850 = vpack.c.b16 %v774, %v770
    %v851 = vpack.c.b16 %v775, %v771
    %v852 = vpack.c.b16 %v780, %v776
    %v853 = vpack.c.b16 %v781, %v777
    %v854 = vpack.c.b16 %v782, %v778
    %v855 = vpack.c.b16 %v783, %v779
    %v856 = vpack.c.b16 %v788, %v784
    %v857 = vpack.c.b16 %v789, %v785
    %v858 = vpack.c.b16 %v790, %v786
    %v859 = vpack.c.b16 %v791, %v787
    %v860 = vpack.c.b16 %v796, %v792
    %v861 = vpack.c.b16 %v797, %v793
    %v862 = vpack.c.b16 %v798, %v794
    %v863 = vpack.c.b16 %v799, %v795
    %928 = vmatprep.subr.bf16.mxu0 %v801
    %929 = vmatpush1.bf16.msra.mxu0 %v800
    %930 = vmatprep.subr.bf16.mxu0 %v805
    %931 = vmatpush1.bf16.msra.mxu0 %v804
    %932 = vmatprep.subr.bf16.mxu0 %v809
    %933 = vmatpush1.bf16.msra.mxu0 %v808
    %934 = vmatprep.subr.bf16.mxu0 %v813
    %935 = vmatpush1.bf16.msra.mxu0 %v812
    %936 = vmatprep.subr.bf16.mxu0 %v817
    %937 = vmatpush1.bf16.msra.mxu0 %v816
    %938 = vmatprep.subr.bf16.mxu0 %v821
    %939 = vmatpush1.bf16.msra.mxu0 %v820
    %940 = vmatprep.subr.bf16.mxu0 %v825
    %941 = vmatpush1.bf16.msra.mxu0 %v824
    %942 = vmatprep.subr.bf16.mxu0 %v829
    %943 = vmatpush1.bf16.msra.mxu0 %v828
    %944 = vmatprep.subr.bf16.mxu0 %v833
    %945 = vmatpush1.bf16.msra.mxu0 %v832
    %946 = vmatprep.subr.bf16.mxu0 %v837
    %947 = vmatpush1.bf16.msra.mxu0 %v836
    %948 = vmatprep.subr.bf16.mxu0 %v841
    %949 = vmatpush1.bf16.msra.mxu0 %v840
    %950 = vmatprep.subr.bf16.mxu0 %v845
    %951 = vmatpush1.bf16.msra.mxu0 %v844
    %952 = vmatprep.subr.bf16.mxu0 %v849
    %953 = vmatpush1.bf16.msra.mxu0 %v848
    %954 = vmatprep.subr.bf16.mxu0 %v853
    %955 = vmatpush1.bf16.msra.mxu0 %v852
    %956 = vmatprep.subr.bf16.mxu0 %v857
    %957 = vmatpush1.bf16.msra.mxu0 %v856
    %958 = vmatprep.subr.bf16.mxu0 %v861
    %959 = vmatpush1.bf16.msra.mxu0 %v860
    %960 = vmatprep.mubr.bf16.mxu0 %v543
    %961 = vmatmul.mubr.bf16.gmra.mrb[0].mxu0 %v542
    %v962 = vpop.f32.mrb[0].mxu0
    %v963 = vadd.f32 0.0, %v962
    %v964 = vpop.f32.mrb[0].mxu0
    %v965 = vadd.f32 0.0, %v964
    %v966 = vpop.f32.mrb[0].mxu0
    %v967 = vpop.f32.mrb[0].mxu0
    %968 = vdwg.mxu0
    %969 = vmatprep.subr.bf16.mxu0 %v803
    %970 = vmatpush1.bf16.msra.mxu0 %v802
    %971 = vmatprep.subr.bf16.mxu0 %v807
    %972 = vmatpush1.bf16.msra.mxu0 %v806
    %973 = vmatprep.subr.bf16.mxu0 %v811
    %974 = vmatpush1.bf16.msra.mxu0 %v810
    %975 = vmatprep.subr.bf16.mxu0 %v815
    %976 = vmatpush1.bf16.msra.mxu0 %v814
    %977 = vmatprep.subr.bf16.mxu0 %v819
    %978 = vmatpush1.bf16.msra.mxu0 %v818
    %979 = vmatprep.subr.bf16.mxu0 %v823
    %980 = vmatpush1.bf16.msra.mxu0 %v822
    %981 = vmatprep.subr.bf16.mxu0 %v827
    %982 = vmatpush1.bf16.msra.mxu0 %v826
    %983 = vmatprep.subr.bf16.mxu0 %v831
    %984 = vmatpush1.bf16.msra.mxu0 %v830
    %985 = vmatprep.subr.bf16.mxu0 %v835
    %986 = vmatpush1.bf16.msra.mxu0 %v834
    %987 = vmatprep.subr.bf16.mxu0 %v839
    %988 = vmatpush1.bf16.msra.mxu0 %v838
    %989 = vmatprep.subr.bf16.mxu0 %v843
    %990 = vmatpush1.bf16.msra.mxu0 %v842
    %991 = vmatprep.subr.bf16.mxu0 %v847
    %992 = vmatpush1.bf16.msra.mxu0 %v846
    %993 = vmatprep.subr.bf16.mxu0 %v851
    %994 = vmatpush1.bf16.msra.mxu0 %v850
    %995 = vmatprep.subr.bf16.mxu0 %v855
    %996 = vmatpush1.bf16.msra.mxu0 %v854
    %997 = vmatprep.subr.bf16.mxu0 %v859
    %998 = vmatpush1.bf16.msra.mxu0 %v858
    %999 = vmatprep.subr.bf16.mxu0 %v863
    %1000 = vmatpush1.bf16.msra.mxu0 %v862
    %1001 = vmatprep.mubr.bf16.mxu0 %v543
    %1002 = vmatmul.mubr.bf16.gmra.mrb[0].mxu0 %v542
    %v1003 = vpop.f32.mrb[0].mxu0
    %v1004 = vadd.f32 0.0, %v1003
    %v1005 = vpop.f32.mrb[0].mxu0
    %v1006 = vadd.f32 0.0, %v1005
    %v1007 = vpop.f32.mrb[0].mxu0
    %v1008 = vpop.f32.mrb[0].mxu0
    %1009 = vdwg.mxu0
    %s1010 = scalar_lea.vmem [#allocation7], 32
    %v1011 = vld [vmem:[%s1010] ss:$8 sm:$0xf]
    %s1012 = scalar_lea.vmem [#allocation7], 33
    %v1013 = vld [vmem:[%s1012] ss:$8 sm:$0xf]
    %v1014 = vrot.slane %v963, 4
    %v1015 = vadd.f32 %v963, %v1014
    %v1016 = vrot.slane %v1015, 2
    %v1017 = vadd.f32 %v1015, %v1016
    %v1018 = vrot.slane %v1017, 1
    %v1019 = vadd.f32 %v1017, %v1018
    %v1020 = vrot.slane %v965, 4
    %v1021 = vadd.f32 %v965, %v1020
    %v1022 = vrot.slane %v1021, 2
    %v1023 = vadd.f32 %v1021, %v1022
    %v1024 = vrot.slane %v1023, 1
    %v1025 = vadd.f32 %v1023, %v1024
    %v1026 = vrot.slane %v1004, 4
    %v1027 = vadd.f32 %v1004, %v1026
    %v1028 = vrot.slane %v1027, 2
    %v1029 = vadd.f32 %v1027, %v1028
    %v1030 = vrot.slane %v1029, 1
    %v1031 = vadd.f32 %v1029, %v1030
    %v1032 = vrot.slane %v1006, 4
    %v1033 = vadd.f32 %v1006, %v1032
    %v1034 = vrot.slane %v1033, 2
    %v1035 = vadd.f32 %v1033, %v1034
    %v1036 = vrot.slane %v1035, 1
    %v1037 = vadd.f32 %v1035, %v1036
    %v1038 = vmul.f32 %v1019, %v119
    %v1039 = vmul.f32 %v1025, %v119
    %v1040 = vmul.f32 %v1031, %v119
    %v1041 = vmul.f32 %v1037, %v119
    %v1042 = vsub.f32 %v963, %v1038
    %v1043 = vsub.f32 %v965, %v1039
    %v1044 = vsub.f32 %v1004, %v1040
    %v1045 = vsub.f32 %v1006, %v1041
    %v1046 = vmul.f32 %v1042, %v1042
    %v1047 = vmul.f32 %v1043, %v1043
    %v1048 = vmul.f32 %v1044, %v1044
    %v1049 = vmul.f32 %v1045, %v1045
    %v1050 = vrot.slane %v1046, 4
    %v1051 = vadd.f32 %v1046, %v1050
    %v1052 = vrot.slane %v1051, 2
    %v1053 = vadd.f32 %v1051, %v1052
    %v1054 = vrot.slane %v1053, 1
    %v1055 = vadd.f32 %v1053, %v1054
    %v1056 = vrot.slane %v1047, 4
    %v1057 = vadd.f32 %v1047, %v1056
    %v1058 = vrot.slane %v1057, 2
    %v1059 = vadd.f32 %v1057, %v1058
    %v1060 = vrot.slane %v1059, 1
    %v1061 = vadd.f32 %v1059, %v1060
    %v1062 = vrot.slane %v1048, 4
    %v1063 = vadd.f32 %v1048, %v1062
    %v1064 = vrot.slane %v1063, 2
    %v1065 = vadd.f32 %v1063, %v1064
    %v1066 = vrot.slane %v1065, 1
    %v1067 = vadd.f32 %v1065, %v1066
    %v1068 = vrot.slane %v1049, 4
    %v1069 = vadd.f32 %v1049, %v1068
    %v1070 = vrot.slane %v1069, 2
    %v1071 = vadd.f32 %v1069, %v1070
    %v1072 = vrot.slane %v1071, 1
    %v1073 = vadd.f32 %v1071, %v1072
    %v1074 = vmul.f32 %v1055, %v119
    %v1075 = vmul.f32 %v1061, %v119
    %v1076 = vmul.f32 %v1067, %v119
    %v1077 = vmul.f32 %v1073, %v119
    %v1078 = vadd.f32 %v1074, 1e-05
    %v1079 = vadd.f32 %v1075, 1e-05
    %v1080 = vadd.f32 %v1076, 1e-05
    %v1081 = vadd.f32 %v1077, 1e-05
    %v1082 = vrsqrt.pop %v1078
    %v1083 = vrsqrt.pop %v1079
    %v1084 = vrsqrt.pop %v1080
    %v1085 = vrsqrt.pop %v1081
    %v1086 = vmul.f32 %v1042, %v1082
    %v1087 = vmul.f32 %v1043, %v1083
    %v1088 = vmul.f32 %v1044, %v1084
    %v1089 = vmul.f32 %v1045, %v1085
    %v1091 = vlaneseq
    %v1092 = vshrl.u32 %v1091, 7
    %v1093 = vsub.s32 0, %v1092
    %v1094 = vrot.slane %v1011, %v1093
    %v1095 = vlaneseq
    %v1096 = vshrl.u32 %v1095, 7
    %v1097 = vsub.s32 1, %v1096
    %v1098 = vrot.slane %v1011, %v1097
    %v1099 = vlaneseq
    %v1100 = vshrl.u32 %v1099, 7
    %v1101 = vsub.s32 2, %v1100
    %v1102 = vrot.slane %v1011, %v1101
    %v1103 = vlaneseq
    %v1104 = vshrl.u32 %v1103, 7
    %v1105 = vsub.s32 3, %v1104
    %v1106 = vrot.slane %v1011, %v1105
    %v1111 = vmul.f32 %v1086, %v1094
    %v1112 = vmul.f32 %v1087, %v1098
    %v1113 = vmul.f32 %v1088, %v1102
    %v1114 = vmul.f32 %v1089, %v1106
    %v1116 = vlaneseq
    %v1117 = vshrl.u32 %v1116, 7
    %v1118 = vsub.s32 0, %v1117
    %v1119 = vrot.slane %v1013, %v1118
    %v1120 = vlaneseq
    %v1121 = vshrl.u32 %v1120, 7
    %v1122 = vsub.s32 1, %v1121
    %v1123 = vrot.slane %v1013, %v1122
    %v1124 = vlaneseq
    %v1125 = vshrl.u32 %v1124, 7
    %v1126 = vsub.s32 2, %v1125
    %v1127 = vrot.slane %v1013, %v1126
    %v1128 = vlaneseq
    %v1129 = vshrl.u32 %v1128, 7
    %v1130 = vsub.s32 3, %v1129
    %v1131 = vrot.slane %v1013, %v1130
    %v1136 = vadd.f32 %v1111, %v1119
    %v1137 = vadd.f32 %v1112, %v1123
    %v1138 = vadd.f32 %v1113, %v1127
    %v1139 = vadd.f32 %v1114, %v1131
    %vm1140 = vcmp.ge.f32.partialorder %v1136, 0.0
    %vm1141 = vcmp.ge.f32.partialorder %v1137, 0.0
    %vm1142 = vcmp.ge.f32.partialorder %v1138, 0.0
    %vm1143 = vcmp.ge.f32.partialorder %v1139, 0.0
    %v1144 = vmul.f32 %v1136, 0.01
    %v1145 = vmul.f32 %v1137, 0.01
    %v1146 = vmul.f32 %v1138, 0.01
    %v1147 = vmul.f32 %v1139, 0.01
    %v1148 = vsel %vm1140, %v1136, %v1144
    %v1149 = vsel %vm1141, %v1137, %v1145
    %v1150 = vsel %vm1142, %v1138, %v1146
    %v1151 = vsel %vm1143, %v1139, %v1147
    %v1152 = vld [vmem:[#allocation5 + $0x600] sm:$0x33]
    %v1153 = vld [vmem:[#allocation5 + $0x608] sm:$0x33]
    %v1154 = vpack.c.bf16 %v1148, %v1148
    %v1155 = vpack.c.bf16 %v1149, %v1149
    %v1156 = vpack.c.bf16 %v1150, %v1150
    %v1157 = vpack.c.bf16 %v1151, %v1151
    %v1158 = vld [vmem:[#allocation7 + $0x22] ss:$0 sm:$0xff]
    %v1161 = vunpack.c.l.b16 %v1152
    %v1162 = vunpack.c.h.b16 %v1152
    %v1163 = vunpack.c.l.b16 %v1153
    %v1164 = vunpack.c.h.b16 %v1153
    %v1165 = vpack.c.b16 %v1161, %v1161
    %v1166 = vpack.c.b16 %v1162, %v1162
    %v1167 = vpack.c.b16 %v1163, %v1163
    %v1168 = vpack.c.b16 %v1164, %v1164
    %1173 = vmatprep.subr.bf16.mxu0 %v1166
    %1174 = vmatpush1.bf16.xpose.msra.mxu0 %v1165
    %1175 = vmatprep.subr.bf16.mxu0 0
    %1176 = vmatpush1.bf16.xpose.msra.mxu0 0
    %1177 = vmatprep.subr.bf16.mxu0 0
    %1178 = vmatpush1.bf16.xpose.msra.mxu0 0
    %1179 = vmatprep.subr.bf16.mxu0 0
    %1180 = vmatpush1.bf16.xpose.msra.mxu0 0
    %1181 = vmatprep.subr.bf16.mxu0 0
    %1182 = vmatpush1.bf16.xpose.msra.mxu0 0
    %1183 = vmatprep.subr.bf16.mxu0 0
    %1184 = vmatpush1.bf16.xpose.msra.mxu0 0
    %1185 = vmatprep.subr.bf16.mxu0 0
    %1186 = vmatpush1.bf16.xpose.msra.mxu0 0
    %1187 = vmatprep.subr.bf16.mxu0 0
    %1188 = vmatpush1.bf16.xpose.msra.mxu0 0
    %1189 = vmatprep.subr.bf16.mxu0 0
    %1190 = vmatpush1.bf16.xpose.msra.mxu0 0
    %1191 = vmatprep.subr.bf16.mxu0 0
    %1192 = vmatpush1.bf16.xpose.msra.mxu0 0
    %1193 = vmatprep.subr.bf16.mxu0 0
    %1194 = vmatpush1.bf16.xpose.msra.mxu0 0
    %1195 = vmatprep.subr.bf16.mxu0 0
    %1196 = vmatpush1.bf16.xpose.msra.mxu0 0
    %1197 = vmatprep.subr.bf16.mxu0 0
    %1198 = vmatpush1.bf16.xpose.msra.mxu0 0
    %1199 = vmatprep.subr.bf16.mxu0 0
    %1200 = vmatpush1.bf16.xpose.msra.mxu0 0
    %1201 = vmatprep.subr.bf16.mxu0 0
    %1202 = vmatpush1.bf16.xpose.msra.mxu0 0
    %1203 = vmatprep.subr.bf16.mxu0 0
    %1204 = vmatpush1.bf16.xpose.msra.mxu0 0
    %1205 = vmatprep.mubr.bf16.mxu0 %v1155
    %1206 = vmatmul.mubr.bf16.gmra.mrb[0].mxu0 %v1154
    %v1207 = vpop.f32.mrb[0].mxu0
    %v1208 = vadd.f32 %v1158, %v1207
    %v1209 = vpop.f32.mrb[0].mxu0
    %v1210 = vpop.f32.mrb[0].mxu0
    %v1211 = vpop.f32.mrb[0].mxu0
    %1212 = vdwg.mxu0
    %1213 = vmatprep.subr.bf16.mxu0 %v1168
    %1214 = vmatpush1.bf16.xpose.msra.mxu0 %v1167
    %1215 = vmatprep.subr.bf16.mxu0 0
    %1216 = vmatpush1.bf16.xpose.msra.mxu0 0
    %1217 = vmatprep.subr.bf16.mxu0 0
    %1218 = vmatpush1.bf16.xpose.msra.mxu0 0
    %1219 = vmatprep.subr.bf16.mxu0 0
    %1220 = vmatpush1.bf16.xpose.msra.mxu0 0
    %1221 = vmatprep.subr.bf16.mxu0 0
    %1222 = vmatpush1.bf16.xpose.msra.mxu0 0
    %1223 = vmatprep.subr.bf16.mxu0 0
    %1224 = vmatpush1.bf16.xpose.msra.mxu0 0
    %1225 = vmatprep.subr.bf16.mxu0 0
    %1226 = vmatpush1.bf16.xpose.msra.mxu0 0
    %1227 = vmatprep.subr.bf16.mxu0 0
    %1228 = vmatpush1.bf16.xpose.msra.mxu0 0
    %1229 = vmatprep.subr.bf16.mxu0 0
    %1230 = vmatpush1.bf16.xpose.msra.mxu0 0
    %1231 = vmatprep.subr.bf16.mxu0 0
    %1232 = vmatpush1.bf16.xpose.msra.mxu0 0
    %1233 = vmatprep.subr.bf16.mxu0 0
    %1234 = vmatpush1.bf16.xpose.msra.mxu0 0
    %1235 = vmatprep.subr.bf16.mxu0 0
    %1236 = vmatpush1.bf16.xpose.msra.mxu0 0
    %1237 = vmatprep.subr.bf16.mxu0 0
    %1238 = vmatpush1.bf16.xpose.msra.mxu0 0
    %1239 = vmatprep.subr.bf16.mxu0 0
    %1240 = vmatpush1.bf16.xpose.msra.mxu0 0
    %1241 = vmatprep.subr.bf16.mxu0 0
    %1242 = vmatpush1.bf16.xpose.msra.mxu0 0
    %1243 = vmatprep.subr.bf16.mxu0 0
    %1244 = vmatpush1.bf16.xpose.msra.mxu0 0
    %1245 = vmatprep.mubr.bf16.mxu0 %v1157
    %1246 = vmatmul.mubr.bf16.gmra.mrb[0].mxu0 %v1156
    %v1247 = vpop.f32.mrb[0].mxu0
    %v1248 = vadd.f32 %v1208, %v1247
    %v1249 = vpop.f32.mrb[0].mxu0
    %v1250 = vpop.f32.mrb[0].mxu0
    %v1251 = vpop.f32.mrb[0].mxu0
    %1252 = vdwg.mxu0
    %v1253 = vadd.f32 %v55, 1e-07
    %v1254 = vlog2.pop %v1253
    %v1255 = vmul.f32 %v1254, 0.6931472
    %v1256 = vsub.f32 0.0, %v1255
    %v1257 = vadd.f32 %v1256, 1e-07
    %v1258 = vlog2.pop %v1257
    %v1259 = vmul.f32 %v1258, 0.6931472
    %v1260 = vsub.f32 0.0, %v1259
    %1262 = vrot.lane.b32.xlu0 %v1260, 112
    %v1263 = vpop.permute.xlu0 %1262
    %v1265 = vadd.f32 %v1248, %v1263
    %v1266 = vmul.f32 %v1265, 2.0
    %vm1267 = vcmask 31744
    %v1268 = vsel %vm1267, %v1266, -inf
    %1269 = vmax.xlane.f32.xlu0 %v1268
    %v1270 = vpop.xlane.xlu0 %1269
    %v1271 = vsub.f32 %v1266, %v1270
    %v1272 = vmul.f32 %v1271, 1.442695
    %v1273 = vpow.pop %v1272
    %v1274 = vsel %vm1267, %v1273, 0.0
    %1275 = vadd.xlane.f32.xlu0 %v1274
    %v1276 = vpop.xlane.xlu0 %1275
    %v1277 = vrcp.pop %v1276
    %v1278 = vmul.f32 %v1273, %v1277
    %1280 = vrot.lane.b32.xlu0 %v55, 124
    %v1281 = vpop.permute.xlu0 %1280
    %v1283 = vsel %vm1267, %v1278, %v1281
    %v1284 = vpack.c.bf16 %v1283, %v1283
    %v1285 = vld [vmem:[#allocation5 + $0x600] sm:$0xcc]
    %v1286 = vld [vmem:[#allocation5 + $0x608] sm:$0xcc]
    %v1287 = vld [vmem:[#allocation5 + $0x610] sm:$0xff]
    %v1288 = vld [vmem:[#allocation5 + $0x618] sm:$0xff]
    %s1289 = scalar_lea.vmem [#allocation7], 35
    %v1290 = vld [vmem:[%s1289] ss:$8 sm:$0xf]
    %v1292 = vlaneseq
    %v1293 = vshrl.u32 %v1292, 7
    %v1294 = vsub.s32 0, %v1293
    %v1295 = vrot.slane %v1290, %v1294
    %v1296 = vlaneseq
    %v1297 = vshrl.u32 %v1296, 7
    %v1298 = vsub.s32 1, %v1297
    %v1299 = vrot.slane %v1290, %v1298
    %v1300 = vlaneseq
    %v1301 = vshrl.u32 %v1300, 7
    %v1302 = vsub.s32 2, %v1301
    %v1303 = vrot.slane %v1290, %v1302
    %v1304 = vlaneseq
    %v1305 = vshrl.u32 %v1304, 7
    %v1306 = vsub.s32 3, %v1305
    %v1307 = vrot.slane %v1290, %v1306
    %v1316 = vunpack.c.l.b16 %v1285
    %v1317 = vunpack.c.h.b16 %v1285
    %v1318 = vunpack.c.l.b16 %v1286
    %v1319 = vunpack.c.h.b16 %v1286
    %v1320 = vunpack.c.l.b16 %v1287
    %v1321 = vunpack.c.h.b16 %v1287
    %v1322 = vunpack.c.l.b16 %v1288
    %v1323 = vunpack.c.h.b16 %v1288
    %v1324 = vpack.c.b16 %v1320, %v1316
    %v1325 = vpack.c.b16 %v1321, %v1317
    %v1326 = vpack.c.b16 %v1322, %v1318
    %v1327 = vpack.c.b16 %v1323, %v1319
    %v1328 = vrot.slane %v1324, 2
    %v1329 = vrot.slane %v1325, 2
    %v1330 = vrot.slane %v1326, 2
    %v1331 = vrot.slane %v1327, 2
    %vm1332 = vcmask 97280
    %v1334 = vsel %vm1332, %v1284, 0
    %vm1336 = vcmask 1045504
    %v1338 = vsel %vm1336, %v1328, 0
    %v1341 = vsel %vm1336, %v1329, 0
    %v1344 = vsel %vm1336, %v1330, 0
    %v1347 = vsel %vm1336, %v1331, 0
    %1349 = vmatprep.subr.bf16.mxu0 %v1341
    %1350 = vmatpush1.bf16.msra.mxu0 %v1338
    %1351 = vmatprep.subr.bf16.mxu0 0
    %1352 = vmatpush1.bf16.msra.mxu0 0
    %1353 = vmatprep.subr.bf16.mxu0 0
    %1354 = vmatpush1.bf16.msra.mxu0 0
    %1355 = vmatprep.subr.bf16.mxu0 0
    %1356 = vmatpush1.bf16.msra.mxu0 0
    %1357 = vmatprep.subr.bf16.mxu0 0
    %1358 = vmatpush1.bf16.msra.mxu0 0
    %1359 = vmatprep.subr.bf16.mxu0 0
    %1360 = vmatpush1.bf16.msra.mxu0 0
    %1361 = vmatprep.subr.bf16.mxu0 0
    %1362 = vmatpush1.bf16.msra.mxu0 0
    %1363 = vmatprep.subr.bf16.mxu0 0
    %1364 = vmatpush1.bf16.msra.mxu0 0
    %1365 = vmatprep.subr.bf16.mxu0 0
    %1366 = vmatpush1.bf16.msra.mxu0 0
    %1367 = vmatprep.subr.bf16.mxu0 0
    %1368 = vmatpush1.bf16.msra.mxu0 0
    %1369 = vmatprep.subr.bf16.mxu0 0
    %1370 = vmatpush1.bf16.msra.mxu0 0
    %1371 = vmatprep.subr.bf16.mxu0 0
    %1372 = vmatpush1.bf16.msra.mxu0 0
    %1373 = vmatprep.subr.bf16.mxu0 0
    %1374 = vmatpush1.bf16.msra.mxu0 0
    %1375 = vmatprep.subr.bf16.mxu0 0
    %1376 = vmatpush1.bf16.msra.mxu0 0
    %1377 = vmatprep.subr.bf16.mxu0 0
    %1378 = vmatpush1.bf16.msra.mxu0 0
    %1379 = vmatprep.subr.bf16.mxu0 0
    %1380 = vmatpush1.bf16.msra.mxu0 0
    %1381 = vmatprep.mubr.bf16.mxu0 0
    %1382 = vmatmul.mubr.bf16.gmra.mrb[0].mxu0 %v1334
    %v1383 = vpop.f32.mrb[0].mxu0
    %v1384 = vadd.f32 %v1295, %v1383
    %v1385 = vpop.f32.mrb[0].mxu0
    %v1386 = vadd.f32 %v1299, %v1385
    %v1387 = vpop.f32.mrb[0].mxu0
    %v1388 = vpop.f32.mrb[0].mxu0
    %1389 = vdwg.mxu0
    %1390 = vmatprep.subr.bf16.mxu0 %v1347
    %1391 = vmatpush1.bf16.msra.mxu0 %v1344
    %1392 = vmatprep.subr.bf16.mxu0 0
    %1393 = vmatpush1.bf16.msra.mxu0 0
    %1394 = vmatprep.subr.bf16.mxu0 0
    %1395 = vmatpush1.bf16.msra.mxu0 0
    %1396 = vmatprep.subr.bf16.mxu0 0
    %1397 = vmatpush1.bf16.msra.mxu0 0
    %1398 = vmatprep.subr.bf16.mxu0 0
    %1399 = vmatpush1.bf16.msra.mxu0 0
    %1400 = vmatprep.subr.bf16.mxu0 0
    %1401 = vmatpush1.bf16.msra.mxu0 0
    %1402 = vmatprep.subr.bf16.mxu0 0
    %1403 = vmatpush1.bf16.msra.mxu0 0
    %1404 = vmatprep.subr.bf16.mxu0 0
    %1405 = vmatpush1.bf16.msra.mxu0 0
    %1406 = vmatprep.subr.bf16.mxu0 0
    %1407 = vmatpush1.bf16.msra.mxu0 0
    %1408 = vmatprep.subr.bf16.mxu0 0
    %1409 = vmatpush1.bf16.msra.mxu0 0
    %1410 = vmatprep.subr.bf16.mxu0 0
    %1411 = vmatpush1.bf16.msra.mxu0 0
    %1412 = vmatprep.subr.bf16.mxu0 0
    %1413 = vmatpush1.bf16.msra.mxu0 0
    %1414 = vmatprep.subr.bf16.mxu0 0
    %1415 = vmatpush1.bf16.msra.mxu0 0
    %1416 = vmatprep.subr.bf16.mxu0 0
    %1417 = vmatpush1.bf16.msra.mxu0 0
    %1418 = vmatprep.subr.bf16.mxu0 0
    %1419 = vmatpush1.bf16.msra.mxu0 0
    %1420 = vmatprep.subr.bf16.mxu0 0
    %1421 = vmatpush1.bf16.msra.mxu0 0
    %1422 = vmatprep.mubr.bf16.mxu0 0
    %1423 = vmatmul.mubr.bf16.gmra.mrb[0].mxu0 %v1334
    %v1424 = vpop.f32.mrb[0].mxu0
    %v1425 = vadd.f32 %v1303, %v1424
    %v1426 = vpop.f32.mrb[0].mxu0
    %v1427 = vadd.f32 %v1307, %v1426
    %v1428 = vpop.f32.mrb[0].mxu0
    %v1429 = vpop.f32.mrb[0].mxu0
    %1430 = vdwg.mxu0
    %v1431 = vpack.c.bf16 %v1384, %v1384
    %v1432 = vpack.c.bf16 %v1386, %v1386
    %v1433 = vpack.c.bf16 %v1425, %v1425
    %v1434 = vpack.c.bf16 %v1427, %v1427
    %v1435 = vld [vmem:[#allocation5 + $0x200] sm:$0xff]
    %v1436 = vld [vmem:[#allocation5 + $0x210] sm:$0xff]
    %v1437 = vld [vmem:[#allocation5 + $0x220] sm:$0xff]
    %v1438 = vld [vmem:[#allocation5 + $0x230] sm:$0xff]
    %v1439 = vld [vmem:[#allocation5 + $0x240] sm:$0xff]
    %v1440 = vld [vmem:[#allocation5 + $0x250] sm:$0xff]
    %v1441 = vld [vmem:[#allocation5 + $0x260] sm:$0xff]
    %v1442 = vld [vmem:[#allocation5 + $0x270] sm:$0xff]
    %v1443 = vld [vmem:[#allocation5 + $0x280] sm:$0xff]
    %v1444 = vld [vmem:[#allocation5 + $0x290] sm:$0xff]
    %v1445 = vld [vmem:[#allocation5 + $0x2a0] sm:$0xff]
    %v1446 = vld [vmem:[#allocation5 + $0x2b0] sm:$0xff]
    %v1447 = vld [vmem:[#allocation5 + $0x2c0] sm:$0xff]
    %v1448 = vld [vmem:[#allocation5 + $0x2d0] sm:$0xff]
    %v1449 = vld [vmem:[#allocation5 + $0x2e0] sm:$0xff]
    %v1450 = vld [vmem:[#allocation5 + $0x2f0] sm:$0xff]
    %v1451 = vld [vmem:[#allocation5 + $0x300] sm:$0xff]
    %v1452 = vld [vmem:[#allocation5 + $0x310] sm:$0xff]
    %v1453 = vld [vmem:[#allocation5 + $0x320] sm:$0xff]
    %v1454 = vld [vmem:[#allocation5 + $0x330] sm:$0xff]
    %v1455 = vld [vmem:[#allocation5 + $0x340] sm:$0xff]
    %v1456 = vld [vmem:[#allocation5 + $0x350] sm:$0xff]
    %v1457 = vld [vmem:[#allocation5 + $0x360] sm:$0xff]
    %v1458 = vld [vmem:[#allocation5 + $0x370] sm:$0xff]
    %v1459 = vld [vmem:[#allocation5 + $0x380] sm:$0xff]
    %v1460 = vld [vmem:[#allocation5 + $0x390] sm:$0xff]
    %v1461 = vld [vmem:[#allocation5 + $0x3a0] sm:$0xff]
    %v1462 = vld [vmem:[#allocation5 + $0x3b0] sm:$0xff]
    %v1463 = vld [vmem:[#allocation5 + $0x3c0] sm:$0xff]
    %v1464 = vld [vmem:[#allocation5 + $0x3d0] sm:$0xff]
    %v1465 = vld [vmem:[#allocation5 + $0x3e0] sm:$0xff]
    %v1466 = vld [vmem:[#allocation5 + $0x3f0] sm:$0xff]
    %v1467 = vld [vmem:[#allocation5 + $0x400] sm:$0xff]
    %v1468 = vld [vmem:[#allocation5 + $0x410] sm:$0xff]
    %v1469 = vld [vmem:[#allocation5 + $0x420] sm:$0xff]
    %v1470 = vld [vmem:[#allocation5 + $0x430] sm:$0xff]
    %v1471 = vld [vmem:[#allocation5 + $0x440] sm:$0xff]
    %v1472 = vld [vmem:[#allocation5 + $0x450] sm:$0xff]
    %v1473 = vld [vmem:[#allocation5 + $0x460] sm:$0xff]
    %v1474 = vld [vmem:[#allocation5 + $0x470] sm:$0xff]
    %v1475 = vld [vmem:[#allocation5 + $0x480] sm:$0xff]
    %v1476 = vld [vmem:[#allocation5 + $0x490] sm:$0xff]
    %v1477 = vld [vmem:[#allocation5 + $0x4a0] sm:$0xff]
    %v1478 = vld [vmem:[#allocation5 + $0x4b0] sm:$0xff]
    %v1479 = vld [vmem:[#allocation5 + $0x4c0] sm:$0xff]
    %v1480 = vld [vmem:[#allocation5 + $0x4d0] sm:$0xff]
    %v1481 = vld [vmem:[#allocation5 + $0x4e0] sm:$0xff]
    %v1482 = vld [vmem:[#allocation5 + $0x4f0] sm:$0xff]
    %v1483 = vld [vmem:[#allocation5 + $0x500] sm:$0xff]
    %v1484 = vld [vmem:[#allocation5 + $0x510] sm:$0xff]
    %v1485 = vld [vmem:[#allocation5 + $0x520] sm:$0xff]
    %v1486 = vld [vmem:[#allocation5 + $0x530] sm:$0xff]
    %v1487 = vld [vmem:[#allocation5 + $0x540] sm:$0xff]
    %v1488 = vld [vmem:[#allocation5 + $0x550] sm:$0xff]
    %v1489 = vld [vmem:[#allocation5 + $0x560] sm:$0xff]
    %v1490 = vld [vmem:[#allocation5 + $0x570] sm:$0xff]
    %v1491 = vld [vmem:[#allocation5 + $0x580] sm:$0xff]
    %v1492 = vld [vmem:[#allocation5 + $0x590] sm:$0xff]
    %v1493 = vld [vmem:[#allocation5 + $0x5a0] sm:$0xff]
    %v1494 = vld [vmem:[#allocation5 + $0x5b0] sm:$0xff]
    %v1495 = vld [vmem:[#allocation5 + $0x5c0] sm:$0xff]
    %v1496 = vld [vmem:[#allocation5 + $0x5d0] sm:$0xff]
    %v1497 = vld [vmem:[#allocation5 + $0x5e0] sm:$0xff]
    %v1498 = vld [vmem:[#allocation5 + $0x5f0] sm:$0xff]
    %v1563 = vunpack.c.l.b16 %v1435
    %v1564 = vunpack.c.h.b16 %v1435
    %v1565 = vunpack.c.l.b16 %v1436
    %v1566 = vunpack.c.h.b16 %v1436
    %v1567 = vunpack.c.l.b16 %v1437
    %v1568 = vunpack.c.h.b16 %v1437
    %v1569 = vunpack.c.l.b16 %v1438
    %v1570 = vunpack.c.h.b16 %v1438
    %v1571 = vunpack.c.l.b16 %v1439
    %v1572 = vunpack.c.h.b16 %v1439
    %v1573 = vunpack.c.l.b16 %v1440
    %v1574 = vunpack.c.h.b16 %v1440
    %v1575 = vunpack.c.l.b16 %v1441
    %v1576 = vunpack.c.h.b16 %v1441
    %v1577 = vunpack.c.l.b16 %v1442
    %v1578 = vunpack.c.h.b16 %v1442
    %v1579 = vunpack.c.l.b16 %v1443
    %v1580 = vunpack.c.h.b16 %v1443
    %v1581 = vunpack.c.l.b16 %v1444
    %v1582 = vunpack.c.h.b16 %v1444
    %v1583 = vunpack.c.l.b16 %v1445
    %v1584 = vunpack.c.h.b16 %v1445
    %v1585 = vunpack.c.l.b16 %v1446
    %v1586 = vunpack.c.h.b16 %v1446
    %v1587 = vunpack.c.l.b16 %v1447
    %v1588 = vunpack.c.h.b16 %v1447
    %v1589 = vunpack.c.l.b16 %v1448
    %v1590 = vunpack.c.h.b16 %v1448
    %v1591 = vunpack.c.l.b16 %v1449
    %v1592 = vunpack.c.h.b16 %v1449
    %v1593 = vunpack.c.l.b16 %v1450
    %v1594 = vunpack.c.h.b16 %v1450
    %v1595 = vunpack.c.l.b16 %v1451
    %v1596 = vunpack.c.h.b16 %v1451
    %v1597 = vunpack.c.l.b16 %v1452
    %v1598 = vunpack.c.h.b16 %v1452
    %v1599 = vunpack.c.l.b16 %v1453
    %v1600 = vunpack.c.h.b16 %v1453
    %v1601 = vunpack.c.l.b16 %v1454
    %v1602 = vunpack.c.h.b16 %v1454
    %v1603 = vunpack.c.l.b16 %v1455
    %v1604 = vunpack.c.h.b16 %v1455
    %v1605 = vunpack.c.l.b16 %v1456
    %v1606 = vunpack.c.h.b16 %v1456
    %v1607 = vunpack.c.l.b16 %v1457
    %v1608 = vunpack.c.h.b16 %v1457
    %v1609 = vunpack.c.l.b16 %v1458
    %v1610 = vunpack.c.h.b16 %v1458
    %v1611 = vunpack.c.l.b16 %v1459
    %v1612 = vunpack.c.h.b16 %v1459
    %v1613 = vunpack.c.l.b16 %v1460
    %v1614 = vunpack.c.h.b16 %v1460
    %v1615 = vunpack.c.l.b16 %v1461
    %v1616 = vunpack.c.h.b16 %v1461
    %v1617 = vunpack.c.l.b16 %v1462
    %v1618 = vunpack.c.h.b16 %v1462
    %v1619 = vunpack.c.l.b16 %v1463
    %v1620 = vunpack.c.h.b16 %v1463
    %v1621 = vunpack.c.l.b16 %v1464
    %v1622 = vunpack.c.h.b16 %v1464
    %v1623 = vunpack.c.l.b16 %v1465
    %v1624 = vunpack.c.h.b16 %v1465
    %v1625 = vunpack.c.l.b16 %v1466
    %v1626 = vunpack.c.h.b16 %v1466
    %v1627 = vunpack.c.l.b16 %v1467
    %v1628 = vunpack.c.h.b16 %v1467
    %v1629 = vunpack.c.l.b16 %v1468
    %v1630 = vunpack.c.h.b16 %v1468
    %v1631 = vunpack.c.l.b16 %v1469
    %v1632 = vunpack.c.h.b16 %v1469
    %v1633 = vunpack.c.l.b16 %v1470
    %v1634 = vunpack.c.h.b16 %v1470
    %v1635 = vunpack.c.l.b16 %v1471
    %v1636 = vunpack.c.h.b16 %v1471
    %v1637 = vunpack.c.l.b16 %v1472
    %v1638 = vunpack.c.h.b16 %v1472
    %v1639 = vunpack.c.l.b16 %v1473
    %v1640 = vunpack.c.h.b16 %v1473
    %v1641 = vunpack.c.l.b16 %v1474
    %v1642 = vunpack.c.h.b16 %v1474
    %v1643 = vunpack.c.l.b16 %v1475
    %v1644 = vunpack.c.h.b16 %v1475
    %v1645 = vunpack.c.l.b16 %v1476
    %v1646 = vunpack.c.h.b16 %v1476
    %v1647 = vunpack.c.l.b16 %v1477
    %v1648 = vunpack.c.h.b16 %v1477
    %v1649 = vunpack.c.l.b16 %v1478
    %v1650 = vunpack.c.h.b16 %v1478
    %v1651 = vunpack.c.l.b16 %v1479
    %v1652 = vunpack.c.h.b16 %v1479
    %v1653 = vunpack.c.l.b16 %v1480
    %v1654 = vunpack.c.h.b16 %v1480
    %v1655 = vunpack.c.l.b16 %v1481
    %v1656 = vunpack.c.h.b16 %v1481
    %v1657 = vunpack.c.l.b16 %v1482
    %v1658 = vunpack.c.h.b16 %v1482
    %v1659 = vunpack.c.l.b16 %v1483
    %v1660 = vunpack.c.h.b16 %v1483
    %v1661 = vunpack.c.l.b16 %v1484
    %v1662 = vunpack.c.h.b16 %v1484
    %v1663 = vunpack.c.l.b16 %v1485
    %v1664 = vunpack.c.h.b16 %v1485
    %v1665 = vunpack.c.l.b16 %v1486
    %v1666 = vunpack.c.h.b16 %v1486
    %v1667 = vunpack.c.l.b16 %v1487
    %v1668 = vunpack.c.h.b16 %v1487
    %v1669 = vunpack.c.l.b16 %v1488
    %v1670 = vunpack.c.h.b16 %v1488
    %v1671 = vunpack.c.l.b16 %v1489
    %v1672 = vunpack.c.h.b16 %v1489
    %v1673 = vunpack.c.l.b16 %v1490
    %v1674 = vunpack.c.h.b16 %v1490
    %v1675 = vunpack.c.l.b16 %v1491
    %v1676 = vunpack.c.h.b16 %v1491
    %v1677 = vunpack.c.l.b16 %v1492
    %v1678 = vunpack.c.h.b16 %v1492
    %v1679 = vunpack.c.l.b16 %v1493
    %v1680 = vunpack.c.h.b16 %v1493
    %v1681 = vunpack.c.l.b16 %v1494
    %v1682 = vunpack.c.h.b16 %v1494
    %v1683 = vunpack.c.l.b16 %v1495
    %v1684 = vunpack.c.h.b16 %v1495
    %v1685 = vunpack.c.l.b16 %v1496
    %v1686 = vunpack.c.h.b16 %v1496
    %v1687 = vunpack.c.l.b16 %v1497
    %v1688 = vunpack.c.h.b16 %v1497
    %v1689 = vunpack.c.l.b16 %v1498
    %v1690 = vunpack.c.h.b16 %v1498
    %v1691 = vpack.c.b16 %v1565, %v1563
    %v1692 = vpack.c.b16 %v1566, %v1564
    %v1693 = vpack.c.b16 %v1569, %v1567
    %v1694 = vpack.c.b16 %v1570, %v1568
    %v1695 = vpack.c.b16 %v1573, %v1571
    %v1696 = vpack.c.b16 %v1574, %v1572
    %v1697 = vpack.c.b16 %v1577, %v1575
    %v1698 = vpack.c.b16 %v1578, %v1576
    %v1699 = vpack.c.b16 %v1581, %v1579
    %v1700 = vpack.c.b16 %v1582, %v1580
    %v1701 = vpack.c.b16 %v1585, %v1583
    %v1702 = vpack.c.b16 %v1586, %v1584
    %v1703 = vpack.c.b16 %v1589, %v1587
    %v1704 = vpack.c.b16 %v1590, %v1588
    %v1705 = vpack.c.b16 %v1593, %v1591
    %v1706 = vpack.c.b16 %v1594, %v1592
    %v1707 = vpack.c.b16 %v1597, %v1595
    %v1708 = vpack.c.b16 %v1598, %v1596
    %v1709 = vpack.c.b16 %v1601, %v1599
    %v1710 = vpack.c.b16 %v1602, %v1600
    %v1711 = vpack.c.b16 %v1605, %v1603
    %v1712 = vpack.c.b16 %v1606, %v1604
    %v1713 = vpack.c.b16 %v1609, %v1607
    %v1714 = vpack.c.b16 %v1610, %v1608
    %v1715 = vpack.c.b16 %v1613, %v1611
    %v1716 = vpack.c.b16 %v1614, %v1612
    %v1717 = vpack.c.b16 %v1617, %v1615
    %v1718 = vpack.c.b16 %v1618, %v1616
    %v1719 = vpack.c.b16 %v1621, %v1619
    %v1720 = vpack.c.b16 %v1622, %v1620
    %v1721 = vpack.c.b16 %v1625, %v1623
    %v1722 = vpack.c.b16 %v1626, %v1624
    %v1723 = vpack.c.b16 %v1629, %v1627
    %v1724 = vpack.c.b16 %v1630, %v1628
    %v1725 = vpack.c.b16 %v1633, %v1631
    %v1726 = vpack.c.b16 %v1634, %v1632
    %v1727 = vpack.c.b16 %v1637, %v1635
    %v1728 = vpack.c.b16 %v1638, %v1636
    %v1729 = vpack.c.b16 %v1641, %v1639
    %v1730 = vpack.c.b16 %v1642, %v1640
    %v1731 = vpack.c.b16 %v1645, %v1643
    %v1732 = vpack.c.b16 %v1646, %v1644
    %v1733 = vpack.c.b16 %v1649, %v1647
    %v1734 = vpack.c.b16 %v1650, %v1648
    %v1735 = vpack.c.b16 %v1653, %v1651
    %v1736 = vpack.c.b16 %v1654, %v1652
    %v1737 = vpack.c.b16 %v1657, %v1655
    %v1738 = vpack.c.b16 %v1658, %v1656
    %v1739 = vpack.c.b16 %v1661, %v1659
    %v1740 = vpack.c.b16 %v1662, %v1660
    %v1741 = vpack.c.b16 %v1665, %v1663
    %v1742 = vpack.c.b16 %v1666, %v1664
    %v1743 = vpack.c.b16 %v1669, %v1667
    %v1744 = vpack.c.b16 %v1670, %v1668
    %v1745 = vpack.c.b16 %v1673, %v1671
    %v1746 = vpack.c.b16 %v1674, %v1672
    %v1747 = vpack.c.b16 %v1677, %v1675
    %v1748 = vpack.c.b16 %v1678, %v1676
    %v1749 = vpack.c.b16 %v1681, %v1679
    %v1750 = vpack.c.b16 %v1682, %v1680
    %v1751 = vpack.c.b16 %v1685, %v1683
    %v1752 = vpack.c.b16 %v1686, %v1684
    %v1753 = vpack.c.b16 %v1689, %v1687
    %v1754 = vpack.c.b16 %v1690, %v1688
    %1819 = vmatprep.subr.bf16.mxu0 %v1692
    %1820 = vmatpush1.bf16.msra.mxu0 %v1691
    %1821 = vmatprep.subr.bf16.mxu0 %v1694
    %1822 = vmatpush1.bf16.msra.mxu0 %v1693
    %1823 = vmatprep.subr.bf16.mxu0 %v1696
    %1824 = vmatpush1.bf16.msra.mxu0 %v1695
    %1825 = vmatprep.subr.bf16.mxu0 %v1698
    %1826 = vmatpush1.bf16.msra.mxu0 %v1697
    %1827 = vmatprep.subr.bf16.mxu0 %v1700
    %1828 = vmatpush1.bf16.msra.mxu0 %v1699
    %1829 = vmatprep.subr.bf16.mxu0 %v1702
    %1830 = vmatpush1.bf16.msra.mxu0 %v1701
    %1831 = vmatprep.subr.bf16.mxu0 %v1704
    %1832 = vmatpush1.bf16.msra.mxu0 %v1703
    %1833 = vmatprep.subr.bf16.mxu0 %v1706
    %1834 = vmatpush1.bf16.msra.mxu0 %v1705
    %1835 = vmatprep.subr.bf16.mxu0 %v1708
    %1836 = vmatpush1.bf16.msra.mxu0 %v1707
    %1837 = vmatprep.subr.bf16.mxu0 %v1710
    %1838 = vmatpush1.bf16.msra.mxu0 %v1709
    %1839 = vmatprep.subr.bf16.mxu0 %v1712
    %1840 = vmatpush1.bf16.msra.mxu0 %v1711
    %1841 = vmatprep.subr.bf16.mxu0 %v1714
    %1842 = vmatpush1.bf16.msra.mxu0 %v1713
    %1843 = vmatprep.subr.bf16.mxu0 %v1716
    %1844 = vmatpush1.bf16.msra.mxu0 %v1715
    %1845 = vmatprep.subr.bf16.mxu0 %v1718
    %1846 = vmatpush1.bf16.msra.mxu0 %v1717
    %1847 = vmatprep.subr.bf16.mxu0 %v1720
    %1848 = vmatpush1.bf16.msra.mxu0 %v1719
    %1849 = vmatprep.subr.bf16.mxu0 %v1722
    %1850 = vmatpush1.bf16.msra.mxu0 %v1721
    %1851 = vmatprep.mubr.bf16.mxu0 %v1432
    %1852 = vmatmul.mubr.bf16.gmra.mrb[0].mxu0 %v1431
    %v1853 = vpop.f32.mrb[0].mxu0
    %v1854 = vadd.f32 0.0, %v1853
    %v1855 = vpop.f32.mrb[0].mxu0
    %v1856 = vadd.f32 0.0, %v1855
    %v1857 = vpop.f32.mrb[0].mxu0
    %v1858 = vpop.f32.mrb[0].mxu0
    %1859 = vdwg.mxu0
    %1860 = vmatprep.subr.bf16.mxu0 %v1724
    %1861 = vmatpush1.bf16.msra.mxu0 %v1723
    %1862 = vmatprep.subr.bf16.mxu0 %v1726
    %1863 = vmatpush1.bf16.msra.mxu0 %v1725
    %1864 = vmatprep.subr.bf16.mxu0 %v1728
    %1865 = vmatpush1.bf16.msra.mxu0 %v1727
    %1866 = vmatprep.subr.bf16.mxu0 %v1730
    %1867 = vmatpush1.bf16.msra.mxu0 %v1729
    %1868 = vmatprep.subr.bf16.mxu0 %v1732
    %1869 = vmatpush1.bf16.msra.mxu0 %v1731
    %1870 = vmatprep.subr.bf16.mxu0 %v1734
    %1871 = vmatpush1.bf16.msra.mxu0 %v1733
    %1872 = vmatprep.subr.bf16.mxu0 %v1736
    %1873 = vmatpush1.bf16.msra.mxu0 %v1735
    %1874 = vmatprep.subr.bf16.mxu0 %v1738
    %1875 = vmatpush1.bf16.msra.mxu0 %v1737
    %1876 = vmatprep.subr.bf16.mxu0 %v1740
    %1877 = vmatpush1.bf16.msra.mxu0 %v1739
    %1878 = vmatprep.subr.bf16.mxu0 %v1742
    %1879 = vmatpush1.bf16.msra.mxu0 %v1741
    %1880 = vmatprep.subr.bf16.mxu0 %v1744
    %1881 = vmatpush1.bf16.msra.mxu0 %v1743
    %1882 = vmatprep.subr.bf16.mxu0 %v1746
    %1883 = vmatpush1.bf16.msra.mxu0 %v1745
    %1884 = vmatprep.subr.bf16.mxu0 %v1748
    %1885 = vmatpush1.bf16.msra.mxu0 %v1747
    %1886 = vmatprep.subr.bf16.mxu0 %v1750
    %1887 = vmatpush1.bf16.msra.mxu0 %v1749
    %1888 = vmatprep.subr.bf16.mxu0 %v1752
    %1889 = vmatpush1.bf16.msra.mxu0 %v1751
    %1890 = vmatprep.subr.bf16.mxu0 %v1754
    %1891 = vmatpush1.bf16.msra.mxu0 %v1753
    %1892 = vmatprep.mubr.bf16.mxu0 %v1434
    %1893 = vmatmul.mubr.bf16.gmra.mrb[0].mxu0 %v1433
    %v1894 = vpop.f32.mrb[0].mxu0
    %v1895 = vadd.f32 %v1854, %v1894
    %v1896 = vpop.f32.mrb[0].mxu0
    %v1897 = vadd.f32 %v1856, %v1896
    %v1898 = vpop.f32.mrb[0].mxu0
    %v1899 = vpop.f32.mrb[0].mxu0
    %1900 = vdwg.mxu0
    %s1901 = scalar_lea.vmem [#allocation7], 36
    %v1902 = vld [vmem:[%s1901] ss:$8 sm:$0x3]
    %s1903 = scalar_lea.vmem [#allocation7], 37
    %v1904 = vld [vmem:[%s1903] ss:$8 sm:$0x3]
    %v1905 = vrot.slane %v1895, 4
    %v1906 = vadd.f32 %v1895, %v1905
    %v1907 = vrot.slane %v1906, 2
    %v1908 = vadd.f32 %v1906, %v1907
    %v1909 = vrot.slane %v1908, 1
    %v1910 = vadd.f32 %v1908, %v1909
    %v1911 = vrot.slane %v1897, 4
    %v1912 = vadd.f32 %v1897, %v1911
    %v1913 = vrot.slane %v1912, 2
    %v1914 = vadd.f32 %v1912, %v1913
    %v1915 = vrot.slane %v1914, 1
    %v1916 = vadd.f32 %v1914, %v1915
    %v1917 = vmul.f32 %v1910, %v119
    %v1918 = vmul.f32 %v1916, %v119
    %v1919 = vsub.f32 %v1895, %v1917
    %v1920 = vsub.f32 %v1897, %v1918
    %v1921 = vmul.f32 %v1919, %v1919
    %v1922 = vmul.f32 %v1920, %v1920
    %v1923 = vrot.slane %v1921, 4
    %v1924 = vadd.f32 %v1921, %v1923
    %v1925 = vrot.slane %v1924, 2
    %v1926 = vadd.f32 %v1924, %v1925
    %v1927 = vrot.slane %v1926, 1
    %v1928 = vadd.f32 %v1926, %v1927
    %v1929 = vrot.slane %v1922, 4
    %v1930 = vadd.f32 %v1922, %v1929
    %v1931 = vrot.slane %v1930, 2
    %v1932 = vadd.f32 %v1930, %v1931
    %v1933 = vrot.slane %v1932, 1
    %v1934 = vadd.f32 %v1932, %v1933
    %v1935 = vmul.f32 %v1928, %v119
    %v1936 = vmul.f32 %v1934, %v119
    %v1937 = vadd.f32 %v1935, 1e-05
    %v1938 = vadd.f32 %v1936, 1e-05
    %v1939 = vrsqrt.pop %v1937
    %v1940 = vrsqrt.pop %v1938
    %v1941 = vmul.f32 %v1919, %v1939
    %v1942 = vmul.f32 %v1920, %v1940
    %v1944 = vlaneseq
    %v1945 = vshrl.u32 %v1944, 7
    %v1946 = vsub.s32 0, %v1945
    %v1947 = vrot.slane %v1902, %v1946
    %v1948 = vlaneseq
    %v1949 = vshrl.u32 %v1948, 7
    %v1950 = vsub.s32 1, %v1949
    %v1951 = vrot.slane %v1902, %v1950
    %v1954 = vmul.f32 %v1941, %v1947
    %v1955 = vmul.f32 %v1942, %v1951
    %v1957 = vlaneseq
    %v1958 = vshrl.u32 %v1957, 7
    %v1959 = vsub.s32 0, %v1958
    %v1960 = vrot.slane %v1904, %v1959
    %v1961 = vlaneseq
    %v1962 = vshrl.u32 %v1961, 7
    %v1963 = vsub.s32 1, %v1962
    %v1964 = vrot.slane %v1904, %v1963
    %v1967 = vadd.f32 %v1954, %v1960
    %v1968 = vadd.f32 %v1955, %v1964
    %vm1969 = vcmp.ge.f32.partialorder %v1967, 0.0
    %vm1970 = vcmp.ge.f32.partialorder %v1968, 0.0
    %v1971 = vmul.f32 %v1967, 0.01
    %v1972 = vmul.f32 %v1968, 0.01
    %v1973 = vsel %vm1969, %v1967, %v1971
    %v1974 = vsel %vm1970, %v1968, %v1972
    %v1975 = vpack.c.bf16 %v1973, %v1973
    %v1976 = vpack.c.bf16 %v1974, %v1974
    %v1977 = vld [vmem:[#allocation5 + $0x308] sm:$0xf]
    %v1978 = vld [vmem:[#allocation5 + $0x318] sm:$0xf]
    %v1979 = vld [vmem:[#allocation5 + $0x328] sm:$0xf]
    %v1980 = vld [vmem:[#allocation5 + $0x338] sm:$0xf]
    %v1981 = vld [vmem:[#allocation5 + $0x348] sm:$0xf]
    %v1982 = vld [vmem:[#allocation5 + $0x358] sm:$0xf]
    %v1983 = vld [vmem:[#allocation5 + $0x368] sm:$0xf]
    %v1984 = vld [vmem:[#allocation5 + $0x378] sm:$0xf]
    %v1985 = vld [vmem:[#allocation5 + $0x388] sm:$0xf]
    %v1986 = vld [vmem:[#allocation5 + $0x398] sm:$0xf]
    %v1987 = vld [vmem:[#allocation5 + $0x3a8] sm:$0xf]
    %v1988 = vld [vmem:[#allocation5 + $0x3b8] sm:$0xf]
    %v1989 = vld [vmem:[#allocation5 + $0x3c8] sm:$0xf]
    %v1990 = vld [vmem:[#allocation5 + $0x3d8] sm:$0xf]
    %v1991 = vld [vmem:[#allocation5 + $0x3e8] sm:$0xf]
    %v1992 = vld [vmem:[#allocation5 + $0x3f8] sm:$0xf]
    %v1993 = vld [vmem:[#allocation5 + $0x408] sm:$0xf]
    %v1994 = vld [vmem:[#allocation5 + $0x418] sm:$0xf]
    %v1995 = vld [vmem:[#allocation5 + $0x428] sm:$0xf]
    %v1996 = vld [vmem:[#allocation5 + $0x438] sm:$0xf]
    %v1997 = vld [vmem:[#allocation5 + $0x448] sm:$0xf]
    %v1998 = vld [vmem:[#allocation5 + $0x458] sm:$0xf]
    %v1999 = vld [vmem:[#allocation5 + $0x468] sm:$0xf]
    %v2000 = vld [vmem:[#allocation5 + $0x478] sm:$0xf]
    %v2001 = vld [vmem:[#allocation5 + $0x488] sm:$0xf]
    %v2002 = vld [vmem:[#allocation5 + $0x498] sm:$0xf]
    %v2003 = vld [vmem:[#allocation5 + $0x4a8] sm:$0xf]
    %v2004 = vld [vmem:[#allocation5 + $0x4b8] sm:$0xf]
    %v2005 = vld [vmem:[#allocation5 + $0x4c8] sm:$0xf]
    %v2006 = vld [vmem:[#allocation5 + $0x4d8] sm:$0xf]
    %v2007 = vld [vmem:[#allocation5 + $0x4e8] sm:$0xf]
    %v2008 = vld [vmem:[#allocation5 + $0x4f8] sm:$0xf]
    %v2041 = vunpack.c.l.b16 %v1977
    %v2042 = vunpack.c.l.b16 %v1978
    %v2043 = vunpack.c.l.b16 %v1979
    %v2044 = vunpack.c.l.b16 %v1980
    %v2045 = vunpack.c.l.b16 %v1981
    %v2046 = vunpack.c.l.b16 %v1982
    %v2047 = vunpack.c.l.b16 %v1983
    %v2048 = vunpack.c.l.b16 %v1984
    %v2049 = vunpack.c.l.b16 %v1985
    %v2050 = vunpack.c.l.b16 %v1986
    %v2051 = vunpack.c.l.b16 %v1987
    %v2052 = vunpack.c.l.b16 %v1988
    %v2053 = vunpack.c.l.b16 %v1989
    %v2054 = vunpack.c.l.b16 %v1990
    %v2055 = vunpack.c.l.b16 %v1991
    %v2056 = vunpack.c.l.b16 %v1992
    %v2057 = vunpack.c.l.b16 %v1993
    %v2058 = vunpack.c.l.b16 %v1994
    %v2059 = vunpack.c.l.b16 %v1995
    %v2060 = vunpack.c.l.b16 %v1996
    %v2061 = vunpack.c.l.b16 %v1997
    %v2062 = vunpack.c.l.b16 %v1998
    %v2063 = vunpack.c.l.b16 %v1999
    %v2064 = vunpack.c.l.b16 %v2000
    %v2065 = vunpack.c.l.b16 %v2001
    %v2066 = vunpack.c.l.b16 %v2002
    %v2067 = vunpack.c.l.b16 %v2003
    %v2068 = vunpack.c.l.b16 %v2004
    %v2069 = vunpack.c.l.b16 %v2005
    %v2070 = vunpack.c.l.b16 %v2006
    %v2071 = vunpack.c.l.b16 %v2007
    %v2072 = vunpack.c.l.b16 %v2008
    %v2073 = vpack.c.b16 %v2042, %v2041
    %v2074 = vpack.c.b16 %v2044, %v2043
    %v2075 = vpack.c.b16 %v2046, %v2045
    %v2076 = vpack.c.b16 %v2048, %v2047
    %v2077 = vpack.c.b16 %v2050, %v2049
    %v2078 = vpack.c.b16 %v2052, %v2051
    %v2079 = vpack.c.b16 %v2054, %v2053
    %v2080 = vpack.c.b16 %v2056, %v2055
    %v2081 = vpack.c.b16 %v2058, %v2057
    %v2082 = vpack.c.b16 %v2060, %v2059
    %v2083 = vpack.c.b16 %v2062, %v2061
    %v2084 = vpack.c.b16 %v2064, %v2063
    %v2085 = vpack.c.b16 %v2066, %v2065
    %v2086 = vpack.c.b16 %v2068, %v2067
    %v2087 = vpack.c.b16 %v2070, %v2069
    %v2088 = vpack.c.b16 %v2072, %v2071
    %2105 = vmatprep.subr.bf16.mxu0 0
    %2106 = vmatpush1.bf16.msra.mxu0 %v2073
    %2107 = vmatprep.subr.bf16.mxu0 0
    %2108 = vmatpush1.bf16.msra.mxu0 %v2074
    %2109 = vmatprep.subr.bf16.mxu0 0
    %2110 = vmatpush1.bf16.msra.mxu0 %v2075
    %2111 = vmatprep.subr.bf16.mxu0 0
    %2112 = vmatpush1.bf16.msra.mxu0 %v2076
    %2113 = vmatprep.subr.bf16.mxu0 0
    %2114 = vmatpush1.bf16.msra.mxu0 %v2077
    %2115 = vmatprep.subr.bf16.mxu0 0
    %2116 = vmatpush1.bf16.msra.mxu0 %v2078
    %2117 = vmatprep.subr.bf16.mxu0 0
    %2118 = vmatpush1.bf16.msra.mxu0 %v2079
    %2119 = vmatprep.subr.bf16.mxu0 0
    %2120 = vmatpush1.bf16.msra.mxu0 %v2080
    %2121 = vmatprep.subr.bf16.mxu0 0
    %2122 = vmatpush1.bf16.msra.mxu0 %v2081
    %2123 = vmatprep.subr.bf16.mxu0 0
    %2124 = vmatpush1.bf16.msra.mxu0 %v2082
    %2125 = vmatprep.subr.bf16.mxu0 0
    %2126 = vmatpush1.bf16.msra.mxu0 %v2083
    %2127 = vmatprep.subr.bf16.mxu0 0
    %2128 = vmatpush1.bf16.msra.mxu0 %v2084
    %2129 = vmatprep.subr.bf16.mxu0 0
    %2130 = vmatpush1.bf16.msra.mxu0 %v2085
    %2131 = vmatprep.subr.bf16.mxu0 0
    %2132 = vmatpush1.bf16.msra.mxu0 %v2086
    %2133 = vmatprep.subr.bf16.mxu0 0
    %2134 = vmatpush1.bf16.msra.mxu0 %v2087
    %2135 = vmatprep.subr.bf16.mxu0 0
    %2136 = vmatpush1.bf16.msra.mxu0 %v2088
    %2137 = vmatprep.mubr.bf16.mxu0 %v1976
    %2138 = vmatmul.mubr.bf16.gmra.mrb[0].mxu0 %v1975
    %v2139 = vpop.f32.mrb[0].mxu0
    %v2140 = vadd.f32 0.0, %v2139
    %v2141 = vpop.f32.mrb[0].mxu0
    %v2142 = vpop.f32.mrb[0].mxu0
    %v2143 = vpop.f32.mrb[0].mxu0
    %2144 = vdwg.mxu0
    %v2145 = vld [vmem:[#allocation7 + $0x26] ss:$0 sm:$0xff]
    %v2146 = vld [vmem:[#allocation7 + $0x27] ss:$0 sm:$0xff]
    %v2147 = vrot.slane %v2140, 4
    %v2148 = vadd.f32 %v2140, %v2147
    %v2149 = vrot.slane %v2148, 2
    %v2150 = vadd.f32 %v2148, %v2149
    %v2151 = vrot.slane %v2150, 1
    %v2152 = vadd.f32 %v2150, %v2151
    %v2153 = vmul.f32 %v2152, %v119
    %v2154 = vsub.f32 %v2140, %v2153
    %v2155 = vmul.f32 %v2154, %v2154
    %v2156 = vrot.slane %v2155, 4
    %v2157 = vadd.f32 %v2155, %v2156
    %v2158 = vrot.slane %v2157, 2
    %v2159 = vadd.f32 %v2157, %v2158
    %v2160 = vrot.slane %v2159, 1
    %v2161 = vadd.f32 %v2159, %v2160
    %v2162 = vmul.f32 %v2161, %v119
    %v2163 = vadd.f32 %v2162, 1e-05
    %v2164 = vrsqrt.pop %v2163
    %v2165 = vmul.f32 %v2154, %v2164
    %v2166 = vmul.f32 %v2165, %v2145
    %v2167 = vadd.f32 %v2166, %v2146
    %vm2168 = vcmp.ge.f32.partialorder %v2167, 0.0
    %v2169 = vmul.f32 %v2167, 0.01
    %v2170 = vsel %vm2168, %v2167, %v2169
    %v2171 = vpack.c.bf16 %v2170, %v2170
    %v2172 = vld [vmem:[#allocation5 + $0x30c] sm:$0xf]
    %v2173 = vld [vmem:[#allocation5 + $0x31c] sm:$0xf]
    %v2174 = vld [vmem:[#allocation5 + $0x32c] sm:$0xf]
    %v2175 = vld [vmem:[#allocation5 + $0x33c] sm:$0xf]
    %v2176 = vld [vmem:[#allocation5 + $0x34c] sm:$0xf]
    %v2177 = vld [vmem:[#allocation5 + $0x35c] sm:$0xf]
    %v2178 = vld [vmem:[#allocation5 + $0x36c] sm:$0xf]
    %v2179 = vld [vmem:[#allocation5 + $0x37c] sm:$0xf]
    %v2180 = vld [vmem:[#allocation5 + $0x38c] sm:$0xf]
    %v2181 = vld [vmem:[#allocation5 + $0x39c] sm:$0xf]
    %v2182 = vld [vmem:[#allocation5 + $0x3ac] sm:$0xf]
    %v2183 = vld [vmem:[#allocation5 + $0x3bc] sm:$0xf]
    %v2184 = vld [vmem:[#allocation5 + $0x3cc] sm:$0xf]
    %v2185 = vld [vmem:[#allocation5 + $0x3dc] sm:$0xf]
    %v2186 = vld [vmem:[#allocation5 + $0x3ec] sm:$0xf]
    %v2187 = vld [vmem:[#allocation5 + $0x3fc] sm:$0xf]
    %v2204 = vunpack.c.l.b16 %v2172
    %v2205 = vunpack.c.l.b16 %v2173
    %v2206 = vunpack.c.l.b16 %v2174
    %v2207 = vunpack.c.l.b16 %v2175
    %v2208 = vunpack.c.l.b16 %v2176
    %v2209 = vunpack.c.l.b16 %v2177
    %v2210 = vunpack.c.l.b16 %v2178
    %v2211 = vunpack.c.l.b16 %v2179
    %v2212 = vunpack.c.l.b16 %v2180
    %v2213 = vunpack.c.l.b16 %v2181
    %v2214 = vunpack.c.l.b16 %v2182
    %v2215 = vunpack.c.l.b16 %v2183
    %v2216 = vunpack.c.l.b16 %v2184
    %v2217 = vunpack.c.l.b16 %v2185
    %v2218 = vunpack.c.l.b16 %v2186
    %v2219 = vunpack.c.l.b16 %v2187
    %v2220 = vpack.c.b16 %v2205, %v2204
    %v2221 = vpack.c.b16 %v2207, %v2206
    %v2222 = vpack.c.b16 %v2209, %v2208
    %v2223 = vpack.c.b16 %v2211, %v2210
    %v2224 = vpack.c.b16 %v2213, %v2212
    %v2225 = vpack.c.b16 %v2215, %v2214
    %v2226 = vpack.c.b16 %v2217, %v2216
    %v2227 = vpack.c.b16 %v2219, %v2218
    %2236 = vmatprep.subr.bf16.mxu0 0
    %2237 = vmatpush1.bf16.msra.mxu0 %v2220
    %2238 = vmatprep.subr.bf16.mxu0 0
    %2239 = vmatpush1.bf16.msra.mxu0 %v2221
    %2240 = vmatprep.subr.bf16.mxu0 0
    %2241 = vmatpush1.bf16.msra.mxu0 %v2222
    %2242 = vmatprep.subr.bf16.mxu0 0
    %2243 = vmatpush1.bf16.msra.mxu0 %v2223
    %2244 = vmatprep.subr.bf16.mxu0 0
    %2245 = vmatpush1.bf16.msra.mxu0 %v2224
    %2246 = vmatprep.subr.bf16.mxu0 0
    %2247 = vmatpush1.bf16.msra.mxu0 %v2225
    %2248 = vmatprep.subr.bf16.mxu0 0
    %2249 = vmatpush1.bf16.msra.mxu0 %v2226
    %2250 = vmatprep.subr.bf16.mxu0 0
    %2251 = vmatpush1.bf16.msra.mxu0 %v2227
    %2252 = vmatprep.subr.bf16.mxu0 0
    %2253 = vmatpush1.bf16.msra.mxu0 0
    %2254 = vmatprep.subr.bf16.mxu0 0
    %2255 = vmatpush1.bf16.msra.mxu0 0
    %2256 = vmatprep.subr.bf16.mxu0 0
    %2257 = vmatpush1.bf16.msra.mxu0 0
    %2258 = vmatprep.subr.bf16.mxu0 0
    %2259 = vmatpush1.bf16.msra.mxu0 0
    %2260 = vmatprep.subr.bf16.mxu0 0
    %2261 = vmatpush1.bf16.msra.mxu0 0
    %2262 = vmatprep.subr.bf16.mxu0 0
    %2263 = vmatpush1.bf16.msra.mxu0 0
    %2264 = vmatprep.subr.bf16.mxu0 0
    %2265 = vmatpush1.bf16.msra.mxu0 0
    %2266 = vmatprep.subr.bf16.mxu0 0
    %2267 = vmatpush1.bf16.msra.mxu0 0
    %2268 = vmatprep.mubr.bf16.mxu0 0
    %2269 = vmatmul.mubr.bf16.gmra.mrb[0].mxu0 %v2171
    %v2270 = vpop.f32.mrb[0].mxu0
    %v2271 = vadd.f32 0.0, %v2270
    %v2272 = vpop.f32.mrb[0].mxu0
    %v2273 = vpop.f32.mrb[0].mxu0
    %v2274 = vpop.f32.mrb[0].mxu0
    %2275 = vdwg.mxu0
    %v2276 = vld [vmem:[#allocation7 + $0x40] ss:$0 sm:$0xff]
    %v2277 = vld [vmem:[#allocation7 + $0x41] ss:$0 sm:$0xff]
    %v2278 = vsel %vm201, %v2271, 0.0
    %v2279 = vrot.slane %v2278, 4
    %v2280 = vadd.f32 %v2278, %v2279
    %v2281 = vrot.slane %v2280, 2
    %v2282 = vadd.f32 %v2280, %v2281
    %v2283 = vrot.slane %v2282, 1
    %v2284 = vadd.f32 %v2282, %v2283
    %v2285 = vmul.f32 %v2284, %v119
    %v2286 = vsub.f32 %v2271, %v2285
    %v2287 = vmul.f32 %v2286, %v2286
    %v2288 = vsel %vm201, %v2287, 0.0
    %v2289 = vrot.slane %v2288, 4
    %v2290 = vadd.f32 %v2288, %v2289
    %v2291 = vrot.slane %v2290, 2
    %v2292 = vadd.f32 %v2290, %v2291
    %v2293 = vrot.slane %v2292, 1
    %v2294 = vadd.f32 %v2292, %v2293
    %v2295 = vmul.f32 %v2294, %v119
    %v2296 = vadd.f32 %v2295, 1e-05
    %v2297 = vrsqrt.pop %v2296
    %v2298 = vmul.f32 %v2286, %v2297
    %v2299 = vmul.f32 %v2298, %v2276
    %v2300 = vadd.f32 %v2299, %v2277
    %vm2301 = vcmp.ge.f32.partialorder %v2300, 0.0
    %v2302 = vmul.f32 %v2300, 0.01
    %v2303 = vsel %vm2301, %v2300, %v2302
    %v2304 = vpack.c.bf16 %v2303, %v2303
    %v2305 = vld [vmem:[#allocation5 + $0x40c] sm:$0xf]
    %v2306 = vld [vmem:[#allocation5 + $0x41c] sm:$0xf]
    %v2307 = vld [vmem:[#allocation5 + $0x42c] sm:$0xf]
    %v2308 = vld [vmem:[#allocation5 + $0x43c] sm:$0xf]
    %v2309 = vld [vmem:[#allocation5 + $0x44c] sm:$0xf]
    %v2310 = vld [vmem:[#allocation5 + $0x45c] sm:$0xf]
    %v2311 = vld [vmem:[#allocation5 + $0x46c] sm:$0xf]
    %v2312 = vld [vmem:[#allocation5 + $0x47c] sm:$0xf]
    %v2321 = vunpack.c.l.b16 %v2305
    %v2322 = vunpack.c.l.b16 %v2306
    %v2323 = vunpack.c.l.b16 %v2307
    %v2324 = vunpack.c.l.b16 %v2308
    %v2325 = vunpack.c.l.b16 %v2309
    %v2326 = vunpack.c.l.b16 %v2310
    %v2327 = vunpack.c.l.b16 %v2311
    %v2328 = vunpack.c.l.b16 %v2312
    %v2329 = vpack.c.b16 %v2322, %v2321
    %v2330 = vpack.c.b16 %v2324, %v2323
    %v2331 = vpack.c.b16 %v2326, %v2325
    %v2332 = vpack.c.b16 %v2328, %v2327
    %v2338 = vsel %vm201, %v2304, 0
    %2340 = vmatprep.subr.bf16.mxu0 0
    %2341 = vmatpush1.bf16.msra.mxu0 %v2329
    %2342 = vmatprep.subr.bf16.mxu0 0
    %2343 = vmatpush1.bf16.msra.mxu0 %v2330
    %2344 = vmatprep.subr.bf16.mxu0 0
    %2345 = vmatpush1.bf16.msra.mxu0 %v2331
    %2346 = vmatprep.subr.bf16.mxu0 0
    %2347 = vmatpush1.bf16.msra.mxu0 %v2332
    %2348 = vmatprep.subr.bf16.mxu0 0
    %2349 = vmatpush1.bf16.msra.mxu0 0
    %2350 = vmatprep.subr.bf16.mxu0 0
    %2351 = vmatpush1.bf16.msra.mxu0 0
    %2352 = vmatprep.subr.bf16.mxu0 0
    %2353 = vmatpush1.bf16.msra.mxu0 0
    %2354 = vmatprep.subr.bf16.mxu0 0
    %2355 = vmatpush1.bf16.msra.mxu0 0
    %2356 = vmatprep.subr.bf16.mxu0 0
    %2357 = vmatpush1.bf16.msra.mxu0 0
    %2358 = vmatprep.subr.bf16.mxu0 0
    %2359 = vmatpush1.bf16.msra.mxu0 0
    %2360 = vmatprep.subr.bf16.mxu0 0
    %2361 = vmatpush1.bf16.msra.mxu0 0
    %2362 = vmatprep.subr.bf16.mxu0 0
    %2363 = vmatpush1.bf16.msra.mxu0 0
    %2364 = vmatprep.subr.bf16.mxu0 0
    %2365 = vmatpush1.bf16.msra.mxu0 0
    %2366 = vmatprep.subr.bf16.mxu0 0
    %2367 = vmatpush1.bf16.msra.mxu0 0
    %2368 = vmatprep.subr.bf16.mxu0 0
    %2369 = vmatpush1.bf16.msra.mxu0 0
    %2370 = vmatprep.subr.bf16.mxu0 0
    %2371 = vmatpush1.bf16.msra.mxu0 0
    %2372 = vmatprep.mubr.bf16.mxu0 0
    %2373 = vmatmul.mubr.bf16.gmra.mrb[0].mxu0 %v2338
    %v2374 = vpop.f32.mrb[0].mxu0
    %v2375 = vadd.f32 0.0, %v2374
    %v2376 = vpop.f32.mrb[0].mxu0
    %v2377 = vpop.f32.mrb[0].mxu0
    %v2378 = vpop.f32.mrb[0].mxu0
    %2379 = vdwg.mxu0
    %v2380 = vld [vmem:[#allocation7 + $0x42] ss:$0 sm:$0xff]
    %v2381 = vld [vmem:[#allocation7 + $0x43] ss:$0 sm:$0xff]
    %v2382 = vsel %vm111, %v2375, 0.0
    %v2383 = vrot.slane %v2382, 4
    %v2384 = vadd.f32 %v2382, %v2383
    %v2385 = vrot.slane %v2384, 2
    %v2386 = vadd.f32 %v2384, %v2385
    %v2387 = vrot.slane %v2386, 1
    %v2388 = vadd.f32 %v2386, %v2387
    %v2389 = vmul.f32 %v2388, %v119
    %v2390 = vsub.f32 %v2375, %v2389
    %v2391 = vmul.f32 %v2390, %v2390
    %v2392 = vsel %vm111, %v2391, 0.0
    %v2393 = vrot.slane %v2392, 4
    %v2394 = vadd.f32 %v2392, %v2393
    %v2395 = vrot.slane %v2394, 2
    %v2396 = vadd.f32 %v2394, %v2395
    %v2397 = vrot.slane %v2396, 1
    %v2398 = vadd.f32 %v2396, %v2397
    %v2399 = vmul.f32 %v2398, %v119
    %v2400 = vadd.f32 %v2399, 1e-05
    %v2401 = vrsqrt.pop %v2400
    %v2402 = vmul.f32 %v2390, %v2401
    %v2403 = vmul.f32 %v2402, %v2380
    %v2404 = vadd.f32 %v2403, %v2381
    %vm2405 = vcmp.ge.f32.partialorder %v2404, 0.0
    %v2406 = vmul.f32 %v2404, 0.01
    %v2407 = vsel %vm2405, %v2404, %v2406
    %v2408 = vpack.c.bf16 %v2407, %v2407
    %v2409 = vld [vmem:[#allocation5 + $0x4ec] sm:$0xf]
    %v2410 = vld [vmem:[#allocation5 + $0x4fc] sm:$0xf]
    %v2411 = vld [vmem:[#allocation5 + $0x50c] sm:$0xf]
    %v2412 = vld [vmem:[#allocation5 + $0x51c] sm:$0xf]
    %v2413 = vld [vmem:[#allocation7 + $0x44] ss:$0 sm:$0xff]
    %v2418 = vunpack.c.l.b16 %v2409
    %v2419 = vunpack.c.l.b16 %v2410
    %v2420 = vunpack.c.l.b16 %v2411
    %v2421 = vunpack.c.l.b16 %v2412
    %v2422 = vpack.c.b16 %v2419, %v2418
    %v2423 = vpack.c.b16 %v2421, %v2420
    %v2427 = vsel %vm111, %v2408, 0
    %2429 = vmatprep.subr.bf16.mxu0 0
    %2430 = vmatpush1.bf16.msra.mxu0 %v2422
    %2431 = vmatprep.subr.bf16.mxu0 0
    %2432 = vmatpush1.bf16.msra.mxu0 %v2423
    %2433 = vmatprep.subr.bf16.mxu0 0
    %2434 = vmatpush1.bf16.msra.mxu0 0
    %2435 = vmatprep.subr.bf16.mxu0 0
    %2436 = vmatpush1.bf16.msra.mxu0 0
    %2437 = vmatprep.subr.bf16.mxu0 0
    %2438 = vmatpush1.bf16.msra.mxu0 0
    %2439 = vmatprep.subr.bf16.mxu0 0
    %2440 = vmatpush1.bf16.msra.mxu0 0
    %2441 = vmatprep.subr.bf16.mxu0 0
    %2442 = vmatpush1.bf16.msra.mxu0 0
    %2443 = vmatprep.subr.bf16.mxu0 0
    %2444 = vmatpush1.bf16.msra.mxu0 0
    %2445 = vmatprep.subr.bf16.mxu0 0
    %2446 = vmatpush1.bf16.msra.mxu0 0
    %2447 = vmatprep.subr.bf16.mxu0 0
    %2448 = vmatpush1.bf16.msra.mxu0 0
    %2449 = vmatprep.subr.bf16.mxu0 0
    %2450 = vmatpush1.bf16.msra.mxu0 0
    %2451 = vmatprep.subr.bf16.mxu0 0
    %2452 = vmatpush1.bf16.msra.mxu0 0
    %2453 = vmatprep.subr.bf16.mxu0 0
    %2454 = vmatpush1.bf16.msra.mxu0 0
    %2455 = vmatprep.subr.bf16.mxu0 0
    %2456 = vmatpush1.bf16.msra.mxu0 0
    %2457 = vmatprep.subr.bf16.mxu0 0
    %2458 = vmatpush1.bf16.msra.mxu0 0
    %2459 = vmatprep.subr.bf16.mxu0 0
    %2460 = vmatpush1.bf16.msra.mxu0 0
    %2461 = vmatprep.mubr.bf16.mxu0 0
    %2462 = vmatmul.mubr.bf16.gmra.mrb[0].mxu0 %v2427
    %v2463 = vpop.f32.mrb[0].mxu0
    %v2464 = vadd.f32 %v2413, %v2463
    %v2465 = vpop.f32.mrb[0].mxu0
    %v2466 = vpop.f32.mrb[0].mxu0
    %v2467 = vpop.f32.mrb[0].mxu0
    %2468 = vdwg.mxu0
    %2470 = vrot.lane.b32.xlu0 %v1248, 8
    %v2471 = vpop.permute.xlu0 %2470
    %vm2473 = vcmask 64512
    %v2474 = vsel %vm2473, %v2464, %v2471
    %v2475 = vsel %vm1332, %v2474, 0.0
    %2476 = vst [vmem:[#allocation8] sm:$0xff] %v2475
    // Predicated region
    $region26: #{tpu_custom_call.1} parent=1 // pred_check
      _
    $region27: #{tpu_custom_call.1} parent=1 // pred_check_branch
      %2478 = sbr.rel (0) target = $region29
    $region28: #{tpu_custom_call.1} parent=1 // pred_region
      %s2480 = ssub.s32 128, 128
      %2481 = vsyncadd [#allocation4], %s2480
      %s2483 = sshll.u32 [#allocation8], 4
      %s2484 = int_to_ptr.vmem [resolvable:$true] %s2483
      %2486 = dma.vmem_to_hbm [thread:$0]  %s2484, 128, %s3, [#allocation4]
    $region29: #{tpu_custom_call.1} parent=1 // pred_fallthru
      _
    // Predicated region
    $region30: #{tpu_custom_call.1} parent=1 // pred_check
      _
    $region31: #{tpu_custom_call.1} parent=1 // pred_check_branch
      %2488 = sbr.rel (0) target = $region33
    $region32: #{tpu_custom_call.1} parent=1 // pred_region
      %2489 = dma.done [#allocation4], 128
    $region33: #{tpu_custom_call.1} parent=1 // pred_fallthru
      _
    %2490 = vsyncpa [#allocation3], 1
    %2491 = vsyncpa [#allocation6], 1
    %2492 = vsyncpa [#allocation4], 1

</llo_original>
